<compile_context>
chip_gen: v6e
topology: v6e:2x2x1
jax: 0.10.0
libtpu: 0.0.40
codegen_flags: <defaults>
</compile_context>

<pallas_src>
import math
import functools

import jax
import jax.numpy as jnp
from jax import lax
from jax.experimental import pallas as pl
from jax.experimental.pallas import tpu as pltpu


def mha_kernel(q_ref, k_ref, v_ref,            # (S, E) bf16 each
               wq_ref, wk_ref, wv_ref,         # (E, E) bf16 (scale folded into wq)
               bq_ref, bk_ref, bv_ref,         # (1, E) f32
               wo_ref, bo_ref,                 # (E, E_pad) bf16 / (1, E_pad) f32
               o_ref,                          # (S, E_pad) out dtype
               attn_ref,                       # (S, E) bf16 scratch
               *, num_heads, head_dim):
    # Full-width input projections: bf16 x bf16, f32 MXU accumulation.
    q = jnp.dot(q_ref[...], wq_ref[...],
                preferred_element_type=jnp.float32) + bq_ref[...]
    k = jnp.dot(k_ref[...], wk_ref[...],
                preferred_element_type=jnp.float32) + bk_ref[...]
    v = jnp.dot(v_ref[...], wv_ref[...],
                preferred_element_type=jnp.float32) + bv_ref[...]

    qb = q.astype(jnp.bfloat16)
    kb = k.astype(jnp.bfloat16)
    vb = v.astype(jnp.bfloat16)

    # Static, fully-unrolled per-head loop (num_heads is a trace-time constant).
    for h in range(num_heads):
        lo = h * head_dim
        q_h = qb[:, lo:lo + head_dim]          # (S, D)
        k_h = kb[:, lo:lo + head_dim]
        v_h = vb[:, lo:lo + head_dim]

        # scores = q_h @ k_h.T without an explicit transpose (contract on D).
        scores = lax.dot_general(
            q_h, k_h, (((1,), (1,)), ((), ())),
            preferred_element_type=jnp.float32)            # (S, S) f32

        # Softmax in f32 (v5e-safe); divide goes to the EUP slot.
        m = jnp.max(scores, axis=-1, keepdims=True)
        e = jnp.exp(scores - m)
        denom = jnp.sum(e, axis=-1, keepdims=True)
        probs = (e * pl.reciprocal(denom, approx=True)).astype(jnp.bfloat16)

        attn_h = jnp.dot(probs, v_h,
                         preferred_element_type=jnp.float32)   # (S, D)

        # Deposit this head's output at its column block (combine_heads).
        attn_ref[:, lo:lo + head_dim] = attn_h.astype(jnp.bfloat16)

    # Single output projection over the full combined-head width (K = E),
    # lane-dense (E_pad) unmasked store.
    o_ref[...] = (jnp.dot(attn_ref[...], wo_ref[...],
                          preferred_element_type=jnp.float32)
                  + bo_ref[...]).astype(o_ref.dtype)


def multi_head_attention(Q, K, V, params, *, num_heads):
    """Q, K, V: (B, S, E) float32.  params: (E,E) weights / (E,) biases (PyTorch layout)."""
    B, S, E = Q.shape
    assert E % num_heads == 0, "embed_dim must be divisible by num_heads"
    D = E // num_heads
    E_pad = ((E + 127) // 128) * 128          # lane-dense output / Wo width

    f32, bf16 = jnp.float32, jnp.bfloat16
    scale = 1.0 / math.sqrt(D)

    # nn.Linear computes x @ W.T + b.  Pre-transpose to (in, out) layout once,
    # fold the 1/sqrt(D) attention scale into Wq / bq, pre-cast to bf16.
    wq = (params["wq"].T * scale).astype(bf16)                      # (E, E)
    wk = params["wk"].T.astype(bf16)
    wv = params["wv"].T.astype(bf16)
    bq = (params["bq"] * scale).reshape(1, E).astype(f32)
    bk = params["bk"].reshape(1, E).astype(f32)
    bv = params["bv"].reshape(1, E).astype(f32)

    # Output projection padded to lane-dense width.
    wo = jnp.pad(params["wo"].T, ((0, 0), (0, E_pad - E))).astype(bf16)   # (E, E_pad)
    bo = jnp.pad(params["bo"], (0, E_pad - E)).reshape(1, E_pad).astype(f32)

    Qb, Kb, Vb = Q.astype(bf16), K.astype(bf16), V.astype(bf16)

    # Per-batch activation / output tiles; weights are grid-invariant (constant
    # index maps -> fetched once and kept VMEM-resident).
    x_spec = pl.BlockSpec((None, S, E), lambda b: (b, 0, 0))
    w_spec = pl.BlockSpec((E, E), lambda b: (0, 0))
    b_spec = pl.BlockSpec((1, E), lambda b: (0, 0))
    wo_spec = pl.BlockSpec((E, E_pad), lambda b: (0, 0))
    bo_spec = pl.BlockSpec((1, E_pad), lambda b: (0, 0))
    out_spec = pl.BlockSpec((None, S, E_pad), lambda b: (b, 0, 0))

    # Explicit VMEM budget (sized from actual block footprint + headroom),
    # clamped to fit v7x's 64 MiB physical VMEM.
    vmem_bytes = (
        2 * 3 * S * E * 2                     # double-buffered bf16 Q/K/V tiles
        + (3 * E * E + E * E_pad) * 2         # resident bf16 weights
        + (3 * E + E_pad) * 4                 # f32 biases
        + 2 * S * E_pad * 4                   # double-buffered f32 output tile
        + S * E * 2                           # bf16 attn scratch
        + 8 * S * max(E, E_pad) * 4           # f32 intermediates headroom
    )
    vmem_limit = int(min(48 * 1024 * 1024, max(16 * 1024 * 1024, 2 * vmem_bytes)))

    cost = pl.CostEstimate(
        flops=2 * B * S * E * (3 * E + E_pad) + 4 * B * S * S * E,
        transcendentals=B * num_heads * S * (S + 1),
        bytes_accessed=(3 * B * S * E * 2                  # bf16 Q/K/V
                        + (3 * E * E + E * E_pad) * 2      # bf16 weights
                        + (3 * E + E_pad) * 4              # f32 biases
                        + B * S * E_pad * 4),              # f32 output
    )

    kernel = functools.partial(mha_kernel, num_heads=num_heads, head_dim=D)

    out_padded = pl.pallas_call(
        kernel,
        out_shape=jax.ShapeDtypeStruct((B, S, E_pad), Q.dtype),
        grid_spec=pltpu.PrefetchScalarGridSpec(
            num_scalar_prefetch=0,
            grid=(B,),
            in_specs=[x_spec, x_spec, x_spec,
                      w_spec, w_spec, w_spec,
                      b_spec, b_spec, b_spec,
                      wo_spec, bo_spec],
            out_specs=out_spec,
            scratch_shapes=[pltpu.VMEM((S, E), jnp.bfloat16)],
        ),
        compiler_params=pltpu.CompilerParams(
            dimension_semantics=("parallel",),
            vmem_limit_bytes=vmem_limit),
        cost_estimate=cost,
    )(Qb, Kb, Vb, wq, wk, wv, bq, bk, bv, wo, bo)

    return out_padded[:, :, :E]


def _reference(Q, K, V, params, *, num_heads):
    """Pure-JAX (f32) mirror of the PyTorch forward for the correctness check."""
    B, S, E = Q.shape
    D = E // num_heads

    def lin(x, w, b):                    # nn.Linear: x @ W.T + b
        return jnp.einsum("bse,oe->bso", x, w) + b

    def split(x):
        return x.reshape(B, S, num_heads, D).transpose(0, 2, 1, 3)

    q = split(lin(Q, params["wq"], params["bq"]))
    k = split(lin(K, params["wk"], params["bk"]))
    v = split(lin(V, params["wv"], params["bv"]))

    scores = jnp.einsum("bhqd,bhkd->bhqk", q, k) / math.sqrt(D)
    probs = jax.nn.softmax(scores, axis=-1)
    attn = jnp.einsum("bhqk,bhkd->bhqd", probs, v)
    attn = attn.transpose(0, 2, 1, 3).reshape(B, S, E)
    return lin(attn, params["wo"], params["bo"])


if __name__ == "__main__":
    embed_dim = 32
    num_heads = 4
    batch = 2
    seq = 8

    key = jax.random.PRNGKey(0)
    keys = jax.random.split(key, 12)

    # Deterministic parameter init (nn.Linear-style uniform bounds).
    bound = 1.0 / math.sqrt(embed_dim)
    params = {
        "wq": jax.random.uniform(keys[0], (embed_dim, embed_dim), jnp.float32, -bound, bound),
        "bq": jax.random.uniform(keys[1], (embed_dim,), jnp.float32, -bound, bound),
        "wk": jax.random.uniform(keys[2], (embed_dim, embed_dim), jnp.float32, -bound, bound),
        "bk": jax.random.uniform(keys[3], (embed_dim,), jnp.float32, -bound, bound),
        "wv": jax.random.uniform(keys[4], (embed_dim, embed_dim), jnp.float32, -bound, bound),
        "bv": jax.random.uniform(keys[5], (embed_dim,), jnp.float32, -bound, bound),
        "wo": jax.random.uniform(keys[6], (embed_dim, embed_dim), jnp.float32, -bound, bound),
        "bo": jax.random.uniform(keys[7], (embed_dim,), jnp.float32, -bound, bound),
    }

    Q = jax.random.normal(keys[8], (batch, seq, embed_dim), jnp.float32)
    K = jax.random.normal(keys[9], (batch, seq, embed_dim), jnp.float32)
    V = jax.random.normal(keys[10], (batch, seq, embed_dim), jnp.float32)

    out = multi_head_attention(Q, K, V, params, num_heads=num_heads)
    out = jax.block_until_ready(out)

    ref = _reference(Q, K, V, params, num_heads=num_heads)
    assert out.shape == (batch, seq, embed_dim)
    # bf16 matmul inputs (f32 accumulation) -> relaxed tolerance vs f32 reference.
    assert jnp.allclose(out, ref, atol=5e-2, rtol=5e-2), "mismatch vs pure-JAX reference"

    print("KERNEL_OK")
</pallas_src>

<mosaic_0001>
module attributes {stable_mosaic.version = 11 : i64} {
  func.func @mha_kernel(%arg0: i32, %arg1: memref<1x8x32xbf16, #tpu.memory_space<vmem>>, %arg2: memref<1x8x32xbf16, #tpu.memory_space<vmem>>, %arg3: memref<1x8x32xbf16, #tpu.memory_space<vmem>>, %arg4: memref<32x32xbf16, #tpu.memory_space<vmem>>, %arg5: memref<32x32xbf16, #tpu.memory_space<vmem>>, %arg6: memref<32x32xbf16, #tpu.memory_space<vmem>>, %arg7: memref<1x32xf32, #tpu.memory_space<vmem>>, %arg8: memref<1x32xf32, #tpu.memory_space<vmem>>, %arg9: memref<1x32xf32, #tpu.memory_space<vmem>>, %arg10: memref<32x128xbf16, #tpu.memory_space<vmem>>, %arg11: memref<1x128xf32, #tpu.memory_space<vmem>>, %arg12: memref<1x8x128xf32, #tpu.memory_space<vmem>>, %arg13: memref<8x32xbf16, #tpu.memory_space<vmem>>) attributes {dimension_semantics = [#tpu.dimension_semantics<parallel>], iteration_bounds = array<i64: 2>, scalar_prefetch = 0 : i64, scratch_operands = 1 : i64, tpu.core_type = #tpu.core_type<tc>, window_params = [{transform_indices = @transform_0, window_bounds = array<i64: 1, 8, 32>}, {transform_indices = @transform_1, window_bounds = array<i64: 1, 8, 32>}, {transform_indices = @transform_2, window_bounds = array<i64: 1, 8, 32>}, {pipeline_mode = #tpu.pipeline_mode<synchronous>, transform_indices = @transform_3, window_bounds = array<i64: 32, 32>}, {pipeline_mode = #tpu.pipeline_mode<synchronous>, transform_indices = @transform_4, window_bounds = array<i64: 32, 32>}, {pipeline_mode = #tpu.pipeline_mode<synchronous>, transform_indices = @transform_5, window_bounds = array<i64: 32, 32>}, {pipeline_mode = #tpu.pipeline_mode<synchronous>, transform_indices = @transform_6, window_bounds = array<i64: 1, 32>}, {pipeline_mode = #tpu.pipeline_mode<synchronous>, transform_indices = @transform_7, window_bounds = array<i64: 1, 32>}, {pipeline_mode = #tpu.pipeline_mode<synchronous>, transform_indices = @transform_8, window_bounds = array<i64: 1, 32>}, {pipeline_mode = #tpu.pipeline_mode<synchronous>, transform_indices = @transform_9, window_bounds = array<i64: 32, 128>}, {pipeline_mode = #tpu.pipeline_mode<synchronous>, transform_indices = @transform_10, window_bounds = array<i64: 1, 128>}, {transform_indices = @transform_11, window_bounds = array<i64: 1, 8, 128>}]} {
    %c0 = arith.constant 0 : index
    %c0_0 = arith.constant 0 : index
    %c0_1 = arith.constant 0 : index
    %0 = vector.load %arg1[%c0, %c0_0, %c0_1] : memref<1x8x32xbf16, #tpu.memory_space<vmem>>, vector<1x8x32xbf16>
    %1 = vector.shape_cast %0 : vector<1x8x32xbf16> to vector<8x32xbf16>
    %c0_2 = arith.constant 0 : index
    %c0_3 = arith.constant 0 : index
    %2 = vector.load %arg4[%c0_2, %c0_3] : memref<32x32xbf16, #tpu.memory_space<vmem>>, vector<32x32xbf16>
    %cst = arith.constant dense<0.000000e+00> : vector<8x32xf32>
    %3 = tpu.matmul %1, %2, %cst {dimension_numbers = #tpu.dot_dimension_numbers<[1], [0], [0], [1], [0, 0, 1, 1], [], []>} : vector<8x32xbf16>, vector<32x32xbf16>, vector<8x32xf32> -> vector<8x32xf32>
    %c0_4 = arith.constant 0 : index
    %c0_5 = arith.constant 0 : index
    %4 = vector.load %arg7[%c0_4, %c0_5] : memref<1x32xf32, #tpu.memory_space<vmem>>, vector<1x32xf32>
    %5 = vector.broadcast %4 : vector<1x32xf32> to vector<8x32xf32>
    %6 = arith.addf %3, %5 : vector<8x32xf32>
    %c0_6 = arith.constant 0 : index
    %c0_7 = arith.constant 0 : index
    %c0_8 = arith.constant 0 : index
    %7 = vector.load %arg2[%c0_6, %c0_7, %c0_8] : memref<1x8x32xbf16, #tpu.memory_space<vmem>>, vector<1x8x32xbf16>
    %8 = vector.shape_cast %7 : vector<1x8x32xbf16> to vector<8x32xbf16>
    %c0_9 = arith.constant 0 : index
    %c0_10 = arith.constant 0 : index
    %9 = vector.load %arg5[%c0_9, %c0_10] : memref<32x32xbf16, #tpu.memory_space<vmem>>, vector<32x32xbf16>
    %cst_11 = arith.constant dense<0.000000e+00> : vector<8x32xf32>
    %10 = tpu.matmul %8, %9, %cst_11 {dimension_numbers = #tpu.dot_dimension_numbers<[1], [0], [0], [1], [0, 0, 1, 1], [], []>} : vector<8x32xbf16>, vector<32x32xbf16>, vector<8x32xf32> -> vector<8x32xf32>
    %c0_12 = arith.constant 0 : index
    %c0_13 = arith.constant 0 : index
    %11 = vector.load %arg8[%c0_12, %c0_13] : memref<1x32xf32, #tpu.memory_space<vmem>>, vector<1x32xf32>
    %12 = vector.broadcast %11 : vector<1x32xf32> to vector<8x32xf32>
    %13 = arith.addf %10, %12 : vector<8x32xf32>
    %c0_14 = arith.constant 0 : index
    %c0_15 = arith.constant 0 : index
    %c0_16 = arith.constant 0 : index
    %14 = vector.load %arg3[%c0_14, %c0_15, %c0_16] : memref<1x8x32xbf16, #tpu.memory_space<vmem>>, vector<1x8x32xbf16>
    %15 = vector.shape_cast %14 : vector<1x8x32xbf16> to vector<8x32xbf16>
    %c0_17 = arith.constant 0 : index
    %c0_18 = arith.constant 0 : index
    %16 = vector.load %arg6[%c0_17, %c0_18] : memref<32x32xbf16, #tpu.memory_space<vmem>>, vector<32x32xbf16>
    %cst_19 = arith.constant dense<0.000000e+00> : vector<8x32xf32>
    %17 = tpu.matmul %15, %16, %cst_19 {dimension_numbers = #tpu.dot_dimension_numbers<[1], [0], [0], [1], [0, 0, 1, 1], [], []>} : vector<8x32xbf16>, vector<32x32xbf16>, vector<8x32xf32> -> vector<8x32xf32>
    %c0_20 = arith.constant 0 : index
    %c0_21 = arith.constant 0 : index
    %18 = vector.load %arg9[%c0_20, %c0_21] : memref<1x32xf32, #tpu.memory_space<vmem>>, vector<1x32xf32>
    %19 = vector.broadcast %18 : vector<1x32xf32> to vector<8x32xf32>
    %20 = arith.addf %17, %19 : vector<8x32xf32>
    %21 = arith.truncf %6 : vector<8x32xf32> to vector<8x32xbf16>
    %22 = arith.truncf %13 : vector<8x32xf32> to vector<8x32xbf16>
    %23 = arith.truncf %20 : vector<8x32xf32> to vector<8x32xbf16>
    %24 = vector.extract_strided_slice %21 {offsets = [0, 0], sizes = [8, 8], strides = [1, 1]} : vector<8x32xbf16> to vector<8x8xbf16>
    %25 = vector.extract_strided_slice %22 {offsets = [0, 0], sizes = [8, 8], strides = [1, 1]} : vector<8x32xbf16> to vector<8x8xbf16>
    %26 = vector.extract_strided_slice %23 {offsets = [0, 0], sizes = [8, 8], strides = [1, 1]} : vector<8x32xbf16> to vector<8x8xbf16>
    %cst_22 = arith.constant dense<0.000000e+00> : vector<8x8xf32>
    %27 = tpu.matmul %24, %25, %cst_22 {dimension_numbers = #tpu.dot_dimension_numbers<[1], [1], [0], [0], [0, 0, 1, 0], [], []>} : vector<8x8xbf16>, vector<8x8xbf16>, vector<8x8xf32> -> vector<8x8xf32>
    %cst_23 = arith.constant dense<0xFF800000> : vector<8xf32>
    %28 = vector.multi_reduction <maximumf>, %27, %cst_23 [1] : vector<8x8xf32> to vector<8xf32>
    %29 = vector.shape_cast %28 : vector<8xf32> to vector<8x1xf32>
    %30 = vector.broadcast %29 : vector<8x1xf32> to vector<8x8xf32>
    %31 = arith.subf %27, %30 : vector<8x8xf32>
    %32 = math.exp %31 : vector<8x8xf32>
    %cst_24 = arith.constant dense<0.000000e+00> : vector<8xf32>
    %33 = vector.multi_reduction <add>, %32, %cst_24 [1] : vector<8x8xf32> to vector<8xf32>
    %34 = vector.shape_cast %33 : vector<8xf32> to vector<8x1xf32>
    %35 = tpu.reciprocal %34 {approx = true} : vector<8x1xf32> -> vector<8x1xf32>
    %36 = vector.broadcast %35 : vector<8x1xf32> to vector<8x8xf32>
    %37 = arith.mulf %32, %36 : vector<8x8xf32>
    %38 = arith.truncf %37 : vector<8x8xf32> to vector<8x8xbf16>
    %cst_25 = arith.constant dense<0.000000e+00> : vector<8x8xf32>
    %39 = tpu.matmul %38, %26, %cst_25 {dimension_numbers = #tpu.dot_dimension_numbers<[1], [0], [0], [1], [0, 0, 1, 1], [], []>} : vector<8x8xbf16>, vector<8x8xbf16>, vector<8x8xf32> -> vector<8x8xf32>
    %40 = arith.truncf %39 : vector<8x8xf32> to vector<8x8xbf16>
    %c0_26 = arith.constant 0 : index
    %c0_27 = arith.constant 0 : index
    %41 = vector.load %arg13[%c0_26, %c0_27] : memref<8x32xbf16, #tpu.memory_space<vmem>>, vector<8x8xbf16>
    tpu.vector_store %arg13[%c0_26, %c0_27], %40 {strides = array<i32>} : memref<8x32xbf16, #tpu.memory_space<vmem>>, vector<8x8xbf16>,
    %42 = vector.extract_strided_slice %21 {offsets = [0, 8], sizes = [8, 8], strides = [1, 1]} : vector<8x32xbf16> to vector<8x8xbf16>
    %43 = vector.extract_strided_slice %22 {offsets = [0, 8], sizes = [8, 8], strides = [1, 1]} : vector<8x32xbf16> to vector<8x8xbf16>
    %44 = vector.extract_strided_slice %23 {offsets = [0, 8], sizes = [8, 8], strides = [1, 1]} : vector<8x32xbf16> to vector<8x8xbf16>
    %cst_28 = arith.constant dense<0.000000e+00> : vector<8x8xf32>
    %45 = tpu.matmul %42, %43, %cst_28 {dimension_numbers = #tpu.dot_dimension_numbers<[1], [1], [0], [0], [0, 0, 1, 0], [], []>} : vector<8x8xbf16>, vector<8x8xbf16>, vector<8x8xf32> -> vector<8x8xf32>
    %cst_29 = arith.constant dense<0xFF800000> : vector<8xf32>
    %46 = vector.multi_reduction <maximumf>, %45, %cst_29 [1] : vector<8x8xf32> to vector<8xf32>
    %47 = vector.shape_cast %46 : vector<8xf32> to vector<8x1xf32>
    %48 = vector.broadcast %47 : vector<8x1xf32> to vector<8x8xf32>
    %49 = arith.subf %45, %48 : vector<8x8xf32>
    %50 = math.exp %49 : vector<8x8xf32>
    %cst_30 = arith.constant dense<0.000000e+00> : vector<8xf32>
    %51 = vector.multi_reduction <add>, %50, %cst_30 [1] : vector<8x8xf32> to vector<8xf32>
    %52 = vector.shape_cast %51 : vector<8xf32> to vector<8x1xf32>
    %53 = tpu.reciprocal %52 {approx = true} : vector<8x1xf32> -> vector<8x1xf32>
    %54 = vector.broadcast %53 : vector<8x1xf32> to vector<8x8xf32>
    %55 = arith.mulf %50, %54 : vector<8x8xf32>
    %56 = arith.truncf %55 : vector<8x8xf32> to vector<8x8xbf16>
    %cst_31 = arith.constant dense<0.000000e+00> : vector<8x8xf32>
    %57 = tpu.matmul %56, %44, %cst_31 {dimension_numbers = #tpu.dot_dimension_numbers<[1], [0], [0], [1], [0, 0, 1, 1], [], []>} : vector<8x8xbf16>, vector<8x8xbf16>, vector<8x8xf32> -> vector<8x8xf32>
    %58 = arith.truncf %57 : vector<8x8xf32> to vector<8x8xbf16>
    %c0_32 = arith.constant 0 : index
    %c8 = arith.constant 8 : index
    %59 = vector.load %arg13[%c0_32, %c8] : memref<8x32xbf16, #tpu.memory_space<vmem>>, vector<8x8xbf16>
    tpu.vector_store %arg13[%c0_32, %c8], %58 {strides = array<i32>} : memref<8x32xbf16, #tpu.memory_space<vmem>>, vector<8x8xbf16>,
    %60 = vector.extract_strided_slice %21 {offsets = [0, 16], sizes = [8, 8], strides = [1, 1]} : vector<8x32xbf16> to vector<8x8xbf16>
    %61 = vector.extract_strided_slice %22 {offsets = [0, 16], sizes = [8, 8], strides = [1, 1]} : vector<8x32xbf16> to vector<8x8xbf16>
    %62 = vector.extract_strided_slice %23 {offsets = [0, 16], sizes = [8, 8], strides = [1, 1]} : vector<8x32xbf16> to vector<8x8xbf16>
    %cst_33 = arith.constant dense<0.000000e+00> : vector<8x8xf32>
    %63 = tpu.matmul %60, %61, %cst_33 {dimension_numbers = #tpu.dot_dimension_numbers<[1], [1], [0], [0], [0, 0, 1, 0], [], []>} : vector<8x8xbf16>, vector<8x8xbf16>, vector<8x8xf32> -> vector<8x8xf32>
    %cst_34 = arith.constant dense<0xFF800000> : vector<8xf32>
    %64 = vector.multi_reduction <maximumf>, %63, %cst_34 [1] : vector<8x8xf32> to vector<8xf32>
    %65 = vector.shape_cast %64 : vector<8xf32> to vector<8x1xf32>
    %66 = vector.broadcast %65 : vector<8x1xf32> to vector<8x8xf32>
    %67 = arith.subf %63, %66 : vector<8x8xf32>
    %68 = math.exp %67 : vector<8x8xf32>
    %cst_35 = arith.constant dense<0.000000e+00> : vector<8xf32>
    %69 = vector.multi_reduction <add>, %68, %cst_35 [1] : vector<8x8xf32> to vector<8xf32>
    %70 = vector.shape_cast %69 : vector<8xf32> to vector<8x1xf32>
    %71 = tpu.reciprocal %70 {approx = true} : vector<8x1xf32> -> vector<8x1xf32>
    %72 = vector.broadcast %71 : vector<8x1xf32> to vector<8x8xf32>
    %73 = arith.mulf %68, %72 : vector<8x8xf32>
    %74 = arith.truncf %73 : vector<8x8xf32> to vector<8x8xbf16>
    %cst_36 = arith.constant dense<0.000000e+00> : vector<8x8xf32>
    %75 = tpu.matmul %74, %62, %cst_36 {dimension_numbers = #tpu.dot_dimension_numbers<[1], [0], [0], [1], [0, 0, 1, 1], [], []>} : vector<8x8xbf16>, vector<8x8xbf16>, vector<8x8xf32> -> vector<8x8xf32>
    %76 = arith.truncf %75 : vector<8x8xf32> to vector<8x8xbf16>
    %c0_37 = arith.constant 0 : index
    %c16 = arith.constant 16 : index
    %77 = vector.load %arg13[%c0_37, %c16] : memref<8x32xbf16, #tpu.memory_space<vmem>>, vector<8x8xbf16>
    tpu.vector_store %arg13[%c0_37, %c16], %76 {strides = array<i32>} : memref<8x32xbf16, #tpu.memory_space<vmem>>, vector<8x8xbf16>,
    %78 = vector.extract_strided_slice %21 {offsets = [0, 24], sizes = [8, 8], strides = [1, 1]} : vector<8x32xbf16> to vector<8x8xbf16>
    %79 = vector.extract_strided_slice %22 {offsets = [0, 24], sizes = [8, 8], strides = [1, 1]} : vector<8x32xbf16> to vector<8x8xbf16>
    %80 = vector.extract_strided_slice %23 {offsets = [0, 24], sizes = [8, 8], strides = [1, 1]} : vector<8x32xbf16> to vector<8x8xbf16>
    %cst_38 = arith.constant dense<0.000000e+00> : vector<8x8xf32>
    %81 = tpu.matmul %78, %79, %cst_38 {dimension_numbers = #tpu.dot_dimension_numbers<[1], [1], [0], [0], [0, 0, 1, 0], [], []>} : vector<8x8xbf16>, vector<8x8xbf16>, vector<8x8xf32> -> vector<8x8xf32>
    %cst_39 = arith.constant dense<0xFF800000> : vector<8xf32>
    %82 = vector.multi_reduction <maximumf>, %81, %cst_39 [1] : vector<8x8xf32> to vector<8xf32>
    %83 = vector.shape_cast %82 : vector<8xf32> to vector<8x1xf32>
    %84 = vector.broadcast %83 : vector<8x1xf32> to vector<8x8xf32>
    %85 = arith.subf %81, %84 : vector<8x8xf32>
    %86 = math.exp %85 : vector<8x8xf32>
    %cst_40 = arith.constant dense<0.000000e+00> : vector<8xf32>
    %87 = vector.multi_reduction <add>, %86, %cst_40 [1] : vector<8x8xf32> to vector<8xf32>
    %88 = vector.shape_cast %87 : vector<8xf32> to vector<8x1xf32>
    %89 = tpu.reciprocal %88 {approx = true} : vector<8x1xf32> -> vector<8x1xf32>
    %90 = vector.broadcast %89 : vector<8x1xf32> to vector<8x8xf32>
    %91 = arith.mulf %86, %90 : vector<8x8xf32>
    %92 = arith.truncf %91 : vector<8x8xf32> to vector<8x8xbf16>
    %cst_41 = arith.constant dense<0.000000e+00> : vector<8x8xf32>
    %93 = tpu.matmul %92, %80, %cst_41 {dimension_numbers = #tpu.dot_dimension_numbers<[1], [0], [0], [1], [0, 0, 1, 1], [], []>} : vector<8x8xbf16>, vector<8x8xbf16>, vector<8x8xf32> -> vector<8x8xf32>
    %94 = arith.truncf %93 : vector<8x8xf32> to vector<8x8xbf16>
    %c0_42 = arith.constant 0 : index
    %c24 = arith.constant 24 : index
    %95 = vector.load %arg13[%c0_42, %c24] : memref<8x32xbf16, #tpu.memory_space<vmem>>, vector<8x8xbf16>
    tpu.vector_store %arg13[%c0_42, %c24], %94 {strides = array<i32>} : memref<8x32xbf16, #tpu.memory_space<vmem>>, vector<8x8xbf16>,
    %c0_43 = arith.constant 0 : index
    %c0_44 = arith.constant 0 : index
    %96 = vector.load %arg13[%c0_43, %c0_44] : memref<8x32xbf16, #tpu.memory_space<vmem>>, vector<8x32xbf16>
    %c0_45 = arith.constant 0 : index
    %c0_46 = arith.constant 0 : index
    %97 = vector.load %arg10[%c0_45, %c0_46] : memref<32x128xbf16, #tpu.memory_space<vmem>>, vector<32x128xbf16>
    %cst_47 = arith.constant dense<0.000000e+00> : vector<8x128xf32>
    %98 = tpu.matmul %96, %97, %cst_47 {dimension_numbers = #tpu.dot_dimension_numbers<[1], [0], [0], [1], [0, 0, 1, 1], [], []>} : vector<8x32xbf16>, vector<32x128xbf16>, vector<8x128xf32> -> vector<8x128xf32>
    %c0_48 = arith.constant 0 : index
    %c0_49 = arith.constant 0 : index
    %99 = vector.load %arg11[%c0_48, %c0_49] : memref<1x128xf32, #tpu.memory_space<vmem>>, vector<1x128xf32>
    %100 = vector.broadcast %99 : vector<1x128xf32> to vector<8x128xf32>
    %101 = arith.addf %98, %100 : vector<8x128xf32>
    %c0_50 = arith.constant 0 : index
    %c0_51 = arith.constant 0 : index
    %c0_52 = arith.constant 0 : index
    %102 = vector.load %arg12[%c0_50, %c0_51, %c0_52] : memref<1x8x128xf32, #tpu.memory_space<vmem>>, vector<1x8x128xf32>
    %103 = vector.shape_cast %102 : vector<1x8x128xf32> to vector<8x128xf32>
    %104 = vector.shape_cast %101 : vector<8x128xf32> to vector<1x8x128xf32>
    tpu.vector_store %arg12[%c0_50, %c0_51, %c0_52], %104 {strides = array<i32>} : memref<1x8x128xf32, #tpu.memory_space<vmem>>, vector<1x8x128xf32>,
    return
  }
  func.func @transform_0(%arg0: i32) -> (i32, i32, i32) {
    %c0_i32 = arith.constant 0 : i32
    %c0_i32_0 = arith.constant 0 : i32
    %c0_i32_1 = arith.constant 0 : i32
    return %arg0, %c0_i32, %c0_i32_0 : i32, i32, i32
  }
  func.func @transform_1(%arg0: i32) -> (i32, i32, i32) {
    %c0_i32 = arith.constant 0 : i32
    %c0_i32_0 = arith.constant 0 : i32
    %c0_i32_1 = arith.constant 0 : i32
    return %arg0, %c0_i32, %c0_i32_0 : i32, i32, i32
  }
  func.func @transform_2(%arg0: i32) -> (i32, i32, i32) {
    %c0_i32 = arith.constant 0 : i32
    %c0_i32_0 = arith.constant 0 : i32
    %c0_i32_1 = arith.constant 0 : i32
    return %arg0, %c0_i32, %c0_i32_0 : i32, i32, i32
  }
  func.func @transform_3(%arg0: i32) -> (i32, i32) {
    %c0_i32 = arith.constant 0 : i32
    %c0_i32_0 = arith.constant 0 : i32
    %c0_i32_1 = arith.constant 0 : i32
    return %c0_i32, %c0_i32_0 : i32, i32
  }
  func.func @transform_4(%arg0: i32) -> (i32, i32) {
    %c0_i32 = arith.constant 0 : i32
    %c0_i32_0 = arith.constant 0 : i32
    %c0_i32_1 = arith.constant 0 : i32
    return %c0_i32, %c0_i32_0 : i32, i32
  }
  func.func @transform_5(%arg0: i32) -> (i32, i32) {
    %c0_i32 = arith.constant 0 : i32
    %c0_i32_0 = arith.constant 0 : i32
    %c0_i32_1 = arith.constant 0 : i32
    return %c0_i32, %c0_i32_0 : i32, i32
  }
  func.func @transform_6(%arg0: i32) -> (i32, i32) {
    %c0_i32 = arith.constant 0 : i32
    %c0_i32_0 = arith.constant 0 : i32
    %c0_i32_1 = arith.constant 0 : i32
    return %c0_i32, %c0_i32_0 : i32, i32
  }
  func.func @transform_7(%arg0: i32) -> (i32, i32) {
    %c0_i32 = arith.constant 0 : i32
    %c0_i32_0 = arith.constant 0 : i32
    %c0_i32_1 = arith.constant 0 : i32
    return %c0_i32, %c0_i32_0 : i32, i32
  }
  func.func @transform_8(%arg0: i32) -> (i32, i32) {
    %c0_i32 = arith.constant 0 : i32
    %c0_i32_0 = arith.constant 0 : i32
    %c0_i32_1 = arith.constant 0 : i32
    return %c0_i32, %c0_i32_0 : i32, i32
  }
  func.func @transform_9(%arg0: i32) -> (i32, i32) {
    %c0_i32 = arith.constant 0 : i32
    %c0_i32_0 = arith.constant 0 : i32
    %c0_i32_1 = arith.constant 0 : i32
    return %c0_i32, %c0_i32_0 : i32, i32
  }
  func.func @transform_10(%arg0: i32) -> (i32, i32) {
    %c0_i32 = arith.constant 0 : i32
    %c0_i32_0 = arith.constant 0 : i32
    %c0_i32_1 = arith.constant 0 : i32
    return %c0_i32, %c0_i32_0 : i32, i32
  }
  func.func @transform_11(%arg0: i32) -> (i32, i32, i32) {
    %c0_i32 = arith.constant 0 : i32
    %c0_i32_0 = arith.constant 0 : i32
    %c0_i32_1 = arith.constant 0 : i32
    return %arg0, %c0_i32, %c0_i32_0 : i32, i32, i32
  }
}

</mosaic_0001>

<llo_original>
// kernel: tpu_custom_call.1
$region0: #{tpu_custom_call.1}
  #allocation0 [shape = 'u32[]', space=smem, size = 0x4, offset = 0x4, fixed_abs, tag = 'smem constant byte address 0x4 - core index']
  #allocation1 [shape = 'u32[144,128]{1,0:T(1,128)}', space=vmem, size = 0x12000, scoped, tag = 'internal scratch']
  #allocation2 [shape = 'bf16[8,32]{1,0:T(8,128)(2,1)}', space=vmem, size = 0x800, scoped, tag = 'scratch operand']
  %s0 = inlined_call_operand.hbm [shape: bf16[2,8,32], index: 0, kind: input, shape index: {}]
  %s1 = inlined_call_operand.hbm [shape: bf16[2,8,32], index: 1, kind: input, shape index: {}]
  %s2 = inlined_call_operand.hbm [shape: bf16[2,8,32], index: 2, kind: input, shape index: {}]
  %s3 = inlined_call_operand.hbm [shape: bf16[32,32], index: 3, kind: input, shape index: {}]
  %s4 = inlined_call_operand.hbm [shape: bf16[32,32], index: 4, kind: input, shape index: {}]
  %s5 = inlined_call_operand.hbm [shape: bf16[32,32], index: 5, kind: input, shape index: {}]
  %s6 = inlined_call_operand.hbm [shape: f32[1,32], index: 6, kind: input, shape index: {}]
  %s7 = inlined_call_operand.hbm [shape: f32[1,32], index: 7, kind: input, shape index: {}]
  %s8 = inlined_call_operand.hbm [shape: f32[1,32], index: 8, kind: input, shape index: {}]
  %s9 = inlined_call_operand.vmem [shape: bf16[32,128], index: 9, kind: input, shape index: {}]
  %s10 = inlined_call_operand.vmem [shape: f32[1,128], index: 10, kind: input, shape index: {}]
  %s11 = inlined_call_operand.hbm [shape: f32[2,8,128], index: 11, kind: output, shape index: {}]
  %s12 = sld [smem:[#allocation0]]
  $region113: #{tpu_custom_call.1} parent=0
    _
  %s14 = ssub.s32 1, %s12
  %s15 = scalar_select 0, %s14, %s12
  $region1: #{tpu_custom_call.1} parent=0
    #allocation3 [shape = 'u8[4096]{0}', space=vmem, size = 0x1000, scoped, tag = 'input window, operand 0']
    #allocation4 [shape = 's32[2]{0}', space=sflag, size = 0x8, scoped, tag = 'scoped memory for tpu_custom_call.1']
    #allocation5 [shape = 's32[2]{0}', space=sflag, size = 0x8, scoped, tag = 'scoped memory for tpu_custom_call.1']
    #allocation6 [shape = 'u8[4096]{0}', space=vmem, size = 0x1000, scoped, tag = 'input window, operand 1']
    #allocation7 [shape = 's32[2]{0}', space=sflag, size = 0x8, scoped, tag = 'scoped memory for tpu_custom_call.1']
    #allocation8 [shape = 'u8[4096]{0}', space=vmem, size = 0x1000, scoped, tag = 'input window, operand 2']
    #allocation9 [shape = 'u8[8192]{0}', space=vmem, size = 0x2000, scoped, tag = 'input window, operand 3, single buffered']
    #allocation10 [shape = 's32[1]{0}', space=sflag, size = 0x4, scoped, tag = 'scoped memory for tpu_custom_call.1']
    #allocation11 [shape = 'u8[8192]{0}', space=vmem, size = 0x2000, scoped, tag = 'input window, operand 4, single buffered']
    #allocation12 [shape = 'u8[8192]{0}', space=vmem, size = 0x2000, scoped, tag = 'input window, operand 5, single buffered']
    #allocation13 [shape = 's32[1]{0}', space=sflag, size = 0x4, scoped, tag = 'scoped memory for tpu_custom_call.1']
    #allocation14 [shape = 'u8[512]{0}', space=vmem, size = 0x400, scoped, tag = 'input window, operand 6, single buffered']
    #allocation15 [shape = 'u8[512]{0}', space=vmem, size = 0x400, scoped, tag = 'input window, operand 7, single buffered']
    #allocation16 [shape = 's32[1]{0}', space=sflag, size = 0x4, scoped, tag = 'scoped memory for tpu_custom_call.1']
    #allocation17 [shape = 'u8[512]{0}', space=vmem, size = 0x400, scoped, tag = 'input window, operand 8, single buffered']
    #allocation18 [shape = 'u8[8192]{0}', space=vmem, size = 0x2000, scoped, tag = 'output window, operand 0']
    %16 = vsyncpa [#allocation4], 0
    %s17 = scalar_lea.sflag [#allocation4], 1
    %18 = vsyncpa %s17, 0
    %19 = vsyncpa [#allocation7], 0
    %s20 = scalar_lea.sflag [#allocation7], 1
    %21 = vsyncpa %s20, 0
    %22 = vsyncpa [#allocation10], 0
    %23 = vsyncpa [#allocation13], 0
    %24 = vsyncpa [#allocation16], 0
    %25 = vsyncpa [#allocation5], 0
    %s26 = scalar_lea.sflag [#allocation5], 1
    %27 = vsyncpa %s26, 0
    loop: start=0, step=1, limit=4
    $region2: #{tpu_custom_call.1} parent=1 // loop_pre_header
      _
    $region3: #{tpu_custom_call.1} parent=1 // loop_header
      %s29 = sphi 0, %s33
      %p30 = scmp.ge.s32.totalorder %s29, 4
      %s39 = sphi 0, %s41
      %s42 = sphi 0, %s39
      %s43 = sphi 0, %s42
      %s59 = sphi 0, %s43
      %s65 = sphi 0, %s67
      %s68 = sphi 0, %s65
      %s69 = sphi 0, %s68
      %s85 = sphi 0, %s69
      %s91 = sphi 0, %s93
      %s94 = sphi 0, %s91
      %s95 = sphi 0, %s94
      %s111 = sphi 0, %s95
      %s115 = sphi 0, %s115
      %s117 = sphi 0, %s115
      %s118 = sphi 0, %s117
      %s132 = sphi 0, %s118
      %s136 = sphi 0, %s136
      %s138 = sphi 0, %s136
      %s139 = sphi 0, %s138
      %s153 = sphi 0, %s139
      %s157 = sphi 0, %s157
      %s159 = sphi 0, %s157
      %s160 = sphi 0, %s159
      %s174 = sphi 0, %s160
      %s178 = sphi 0, %s178
      %s180 = sphi 0, %s178
      %s181 = sphi 0, %s180
      %s195 = sphi 0, %s181
      %s199 = sphi 0, %s199
      %s201 = sphi 0, %s199
      %s202 = sphi 0, %s201
      %s216 = sphi 0, %s202
      %s220 = sphi 0, %s220
      %s222 = sphi 0, %s220
      %s223 = sphi 0, %s222
      %s237 = sphi 0, %s223
      %s241 = sphi 0, %s241
      %s243 = sphi 0, %s241
      %s244 = sphi 0, %s243
      %s258 = sphi 0, %s244
      %s262 = sphi 0, %s262
      %s264 = sphi 0, %s262
      %s265 = sphi 0, %s264
      %s279 = sphi 0, %s265
      %s285 = sphi 0, %s287
      %s288 = sphi 0, %s285
      %s289 = sphi 0, %s288
      %s305 = sphi 0, %s289
    $region4: #{tpu_custom_call.1} parent=1 // loop_header_branch
      %32 = sbr.rel (%p30) target = $region8
    $region5: #{tpu_custom_call.1} parent=1 // loop_body
      %s34 = ssub.s32 %s29, 1
      %s35 = ssub.s32 %s29, 2
      %s36 = sadd.s32 %s29, 1
      %s37 = ssub.s32 %s29, %s36
      %p38 = scmp.eq.s32.totalorder %s37, 0
      %s40 = sadd.s32 %s39, 1
      %s41 = scalar_select %p38, %s39, %s40
      %p44 = pneg %p38
      %p45 = scmp.eq.s32.totalorder %s29, 1
      %p46 = por %p44, %p45
      %p47 = scmp.ne.s32.totalorder %s39, %s42
      %p48 = scmp.eq.s32.totalorder %s29, 0
      %p49 = por %p47, %p48
      %p50 = scmp.ne.s32.totalorder %s39, %s42
      %p51 = scmp.eq.s32.totalorder %s34, 1
      %p52 = por %p50, %p51
      %p53 = scmp.ne.s32.totalorder %s42, %s43
      %p54 = scmp.eq.s32.totalorder %s34, 0
      %p55 = por %p53, %p54
      %p56 = scmp.ne.s32.totalorder %s42, %s43
      %p57 = scmp.eq.s32.totalorder %s35, 1
      %p58 = por %p56, %p57
      %p60 = scmp.ne.s32.totalorder %s43, %s59
      %p61 = scmp.eq.s32.totalorder %s35, 0
      %p62 = por %p60, %p61
      %s63 = ssub.s32 %s29, %s36
      %p64 = scmp.eq.s32.totalorder %s63, 0
      %s66 = sadd.s32 %s65, 1
      %s67 = scalar_select %p64, %s65, %s66
      %p70 = pneg %p64
      %p71 = scmp.eq.s32.totalorder %s29, 1
      %p72 = por %p70, %p71
      %p73 = scmp.ne.s32.totalorder %s65, %s68
      %p74 = scmp.eq.s32.totalorder %s29, 0
      %p75 = por %p73, %p74
      %p76 = scmp.ne.s32.totalorder %s65, %s68
      %p77 = scmp.eq.s32.totalorder %s34, 1
      %p78 = por %p76, %p77
      %p79 = scmp.ne.s32.totalorder %s68, %s69
      %p80 = scmp.eq.s32.totalorder %s34, 0
      %p81 = por %p79, %p80
      %p82 = scmp.ne.s32.totalorder %s68, %s69
      %p83 = scmp.eq.s32.totalorder %s35, 1
      %p84 = por %p82, %p83
      %p86 = scmp.ne.s32.totalorder %s69, %s85
      %p87 = scmp.eq.s32.totalorder %s35, 0
      %p88 = por %p86, %p87
      %s89 = ssub.s32 %s29, %s36
      %p90 = scmp.eq.s32.totalorder %s89, 0
      %s92 = sadd.s32 %s91, 1
      %s93 = scalar_select %p90, %s91, %s92
      %p96 = pneg %p90
      %p97 = scmp.eq.s32.totalorder %s29, 1
      %p98 = por %p96, %p97
      %p99 = scmp.ne.s32.totalorder %s91, %s94
      %p100 = scmp.eq.s32.totalorder %s29, 0
      %p101 = por %p99, %p100
      %p102 = scmp.ne.s32.totalorder %s91, %s94
      %p103 = scmp.eq.s32.totalorder %s34, 1
      %p104 = por %p102, %p103
      %p105 = scmp.ne.s32.totalorder %s94, %s95
      %p106 = scmp.eq.s32.totalorder %s34, 0
      %p107 = por %p105, %p106
      %p108 = scmp.ne.s32.totalorder %s94, %s95
      %p109 = scmp.eq.s32.totalorder %s35, 1
      %p110 = por %p108, %p109
      %p112 = scmp.ne.s32.totalorder %s95, %s111
      %p113 = scmp.eq.s32.totalorder %s35, 0
      %p114 = por %p112, %p113
      %s116 = sadd.s32 %s115, 1
      %p119 = scmp.eq.s32.totalorder %s29, 1
      %p120 = scmp.ne.s32.totalorder %s115, %s117
      %p121 = scmp.eq.s32.totalorder %s29, 0
      %p122 = por %p120, %p121
      %p123 = scmp.ne.s32.totalorder %s115, %s117
      %p124 = scmp.eq.s32.totalorder %s34, 1
      %p125 = por %p123, %p124
      %p126 = scmp.ne.s32.totalorder %s117, %s118
      %p127 = scmp.eq.s32.totalorder %s34, 0
      %p128 = por %p126, %p127
      %p129 = scmp.ne.s32.totalorder %s117, %s118
      %p130 = scmp.eq.s32.totalorder %s35, 1
      %p131 = por %p129, %p130
      %p133 = scmp.ne.s32.totalorder %s118, %s132
      %p134 = scmp.eq.s32.totalorder %s35, 0
      %p135 = por %p133, %p134
      %s137 = sadd.s32 %s136, 1
      %p140 = scmp.eq.s32.totalorder %s29, 1
      %p141 = scmp.ne.s32.totalorder %s136, %s138
      %p142 = scmp.eq.s32.totalorder %s29, 0
      %p143 = por %p141, %p142
      %p144 = scmp.ne.s32.totalorder %s136, %s138
      %p145 = scmp.eq.s32.totalorder %s34, 1
      %p146 = por %p144, %p145
      %p147 = scmp.ne.s32.totalorder %s138, %s139
      %p148 = scmp.eq.s32.totalorder %s34, 0
      %p149 = por %p147, %p148
      %p150 = scmp.ne.s32.totalorder %s138, %s139
      %p151 = scmp.eq.s32.totalorder %s35, 1
      %p152 = por %p150, %p151
      %p154 = scmp.ne.s32.totalorder %s139, %s153
      %p155 = scmp.eq.s32.totalorder %s35, 0
      %p156 = por %p154, %p155
      %s158 = sadd.s32 %s157, 1
      %p161 = scmp.eq.s32.totalorder %s29, 1
      %p162 = scmp.ne.s32.totalorder %s157, %s159
      %p163 = scmp.eq.s32.totalorder %s29, 0
      %p164 = por %p162, %p163
      %p165 = scmp.ne.s32.totalorder %s157, %s159
      %p166 = scmp.eq.s32.totalorder %s34, 1
      %p167 = por %p165, %p166
      %p168 = scmp.ne.s32.totalorder %s159, %s160
      %p169 = scmp.eq.s32.totalorder %s34, 0
      %p170 = por %p168, %p169
      %p171 = scmp.ne.s32.totalorder %s159, %s160
      %p172 = scmp.eq.s32.totalorder %s35, 1
      %p173 = por %p171, %p172
      %p175 = scmp.ne.s32.totalorder %s160, %s174
      %p176 = scmp.eq.s32.totalorder %s35, 0
      %p177 = por %p175, %p176
      %s179 = sadd.s32 %s178, 1
      %p182 = scmp.eq.s32.totalorder %s29, 1
      %p183 = scmp.ne.s32.totalorder %s178, %s180
      %p184 = scmp.eq.s32.totalorder %s29, 0
      %p185 = por %p183, %p184
      %p186 = scmp.ne.s32.totalorder %s178, %s180
      %p187 = scmp.eq.s32.totalorder %s34, 1
      %p188 = por %p186, %p187
      %p189 = scmp.ne.s32.totalorder %s180, %s181
      %p190 = scmp.eq.s32.totalorder %s34, 0
      %p191 = por %p189, %p190
      %p192 = scmp.ne.s32.totalorder %s180, %s181
      %p193 = scmp.eq.s32.totalorder %s35, 1
      %p194 = por %p192, %p193
      %p196 = scmp.ne.s32.totalorder %s181, %s195
      %p197 = scmp.eq.s32.totalorder %s35, 0
      %p198 = por %p196, %p197
      %s200 = sadd.s32 %s199, 1
      %p203 = scmp.eq.s32.totalorder %s29, 1
      %p204 = scmp.ne.s32.totalorder %s199, %s201
      %p205 = scmp.eq.s32.totalorder %s29, 0
      %p206 = por %p204, %p205
      %p207 = scmp.ne.s32.totalorder %s199, %s201
      %p208 = scmp.eq.s32.totalorder %s34, 1
      %p209 = por %p207, %p208
      %p210 = scmp.ne.s32.totalorder %s201, %s202
      %p211 = scmp.eq.s32.totalorder %s34, 0
      %p212 = por %p210, %p211
      %p213 = scmp.ne.s32.totalorder %s201, %s202
      %p214 = scmp.eq.s32.totalorder %s35, 1
      %p215 = por %p213, %p214
      %p217 = scmp.ne.s32.totalorder %s202, %s216
      %p218 = scmp.eq.s32.totalorder %s35, 0
      %p219 = por %p217, %p218
      %s221 = sadd.s32 %s220, 1
      %p224 = scmp.eq.s32.totalorder %s29, 1
      %p225 = scmp.ne.s32.totalorder %s220, %s222
      %p226 = scmp.eq.s32.totalorder %s29, 0
      %p227 = por %p225, %p226
      %p228 = scmp.ne.s32.totalorder %s220, %s222
      %p229 = scmp.eq.s32.totalorder %s34, 1
      %p230 = por %p228, %p229
      %p231 = scmp.ne.s32.totalorder %s222, %s223
      %p232 = scmp.eq.s32.totalorder %s34, 0
      %p233 = por %p231, %p232
      %p234 = scmp.ne.s32.totalorder %s222, %s223
      %p235 = scmp.eq.s32.totalorder %s35, 1
      %p236 = por %p234, %p235
      %p238 = scmp.ne.s32.totalorder %s223, %s237
      %p239 = scmp.eq.s32.totalorder %s35, 0
      %p240 = por %p238, %p239
      %s242 = sadd.s32 %s241, 1
      %p245 = scmp.eq.s32.totalorder %s29, 1
      %p246 = scmp.ne.s32.totalorder %s241, %s243
      %p247 = scmp.eq.s32.totalorder %s29, 0
      %p248 = por %p246, %p247
      %p249 = scmp.ne.s32.totalorder %s241, %s243
      %p250 = scmp.eq.s32.totalorder %s34, 1
      %p251 = por %p249, %p250
      %p252 = scmp.ne.s32.totalorder %s243, %s244
      %p253 = scmp.eq.s32.totalorder %s34, 0
      %p254 = por %p252, %p253
      %p255 = scmp.ne.s32.totalorder %s243, %s244
      %p256 = scmp.eq.s32.totalorder %s35, 1
      %p257 = por %p255, %p256
      %p259 = scmp.ne.s32.totalorder %s244, %s258
      %p260 = scmp.eq.s32.totalorder %s35, 0
      %p261 = por %p259, %p260
      %s263 = sadd.s32 %s262, 1
      %p266 = scmp.eq.s32.totalorder %s29, 1
      %p267 = scmp.ne.s32.totalorder %s262, %s264
      %p268 = scmp.eq.s32.totalorder %s29, 0
      %p269 = por %p267, %p268
      %p270 = scmp.ne.s32.totalorder %s262, %s264
      %p271 = scmp.eq.s32.totalorder %s34, 1
      %p272 = por %p270, %p271
      %p273 = scmp.ne.s32.totalorder %s264, %s265
      %p274 = scmp.eq.s32.totalorder %s34, 0
      %p275 = por %p273, %p274
      %p276 = scmp.ne.s32.totalorder %s264, %s265
      %p277 = scmp.eq.s32.totalorder %s35, 1
      %p278 = por %p276, %p277
      %p280 = scmp.ne.s32.totalorder %s265, %s279
      %p281 = scmp.eq.s32.totalorder %s35, 0
      %p282 = por %p280, %p281
      %s283 = ssub.s32 %s29, %s36
      %p284 = scmp.eq.s32.totalorder %s283, 0
      %s286 = sadd.s32 %s285, 1
      %s287 = scalar_select %p284, %s285, %s286
      %p290 = pneg %p284
      %p291 = scmp.eq.s32.totalorder %s29, 1
      %p292 = por %p290, %p291
      %p293 = scmp.ne.s32.totalorder %s285, %s288
      %p294 = scmp.eq.s32.totalorder %s29, 0
      %p295 = por %p293, %p294
      %p296 = scmp.ne.s32.totalorder %s285, %s288
      %p297 = scmp.eq.s32.totalorder %s34, 1
      %p298 = por %p296, %p297
      %p299 = scmp.ne.s32.totalorder %s288, %s289
      %p300 = scmp.eq.s32.totalorder %s34, 0
      %p301 = por %p299, %p300
      %p302 = scmp.ne.s32.totalorder %s288, %s289
      %p303 = scmp.eq.s32.totalorder %s35, 1
      %p304 = por %p302, %p303
      %p306 = scmp.ne.s32.totalorder %s289, %s305
      %p307 = scmp.eq.s32.totalorder %s35, 0
      %p308 = por %p306, %p307
      %p309 = scmp.le.s32.totalorder 1, %s29
      %p310 = scmp.lt.s32.totalorder %s29, 3
      %p311 = pnand %p309, %p310
      %p312 = pneg %p311
      // Predicated region
      $region9: #{tpu_custom_call.1} parent=5 // pred_check
        _
      $region10: #{tpu_custom_call.1} parent=5 // pred_check_branch
        %314 = sbr.rel (%p311) target = $region12
      $region11: #{tpu_custom_call.1} parent=5 // pred_region
        %s315 = ssub.s32 %s29, 1
        // Predicated region
        $region13: #{tpu_custom_call.1} parent=11 // pred_check
          %p316 = pneg %p128
        $region14: #{tpu_custom_call.1} parent=11 // pred_check_branch
          %318 = sbr.rel (%p316) target = $region16
        $region15: #{tpu_custom_call.1} parent=11 // pred_region
          %s320 = ssub.s32 256, 256
          %321 = vsyncadd [#allocation10], %s320
          %s322 = sshll.u32 [#allocation9], 4
          %s323 = int_to_ptr.vmem [resolvable:$true] %s322
          %328 = dma.hbm_to_vmem [thread:$0]  %s3, 256, %s323, [#allocation10], 64, 64, 4
        $region16: #{tpu_custom_call.1} parent=11 // pred_fallthru
          _
        // Predicated region
        $region17: #{tpu_custom_call.1} parent=11 // pred_check
          %p329 = pneg %p149
        $region18: #{tpu_custom_call.1} parent=11 // pred_check_branch
          %331 = sbr.rel (%p329) target = $region20
        $region19: #{tpu_custom_call.1} parent=11 // pred_region
          %s333 = ssub.s32 256, 256
          %334 = vsyncadd [#allocation10], %s333
          %s335 = sshll.u32 [#allocation11], 4
          %s336 = int_to_ptr.vmem [resolvable:$true] %s335
          %341 = dma.hbm_to_vmem [thread:$0]  %s4, 256, %s336, [#allocation10], 64, 64, 4
        $region20: #{tpu_custom_call.1} parent=11 // pred_fallthru
          _
        // Predicated region
        $region21: #{tpu_custom_call.1} parent=11 // pred_check
          %p342 = pneg %p170
        $region22: #{tpu_custom_call.1} parent=11 // pred_check_branch
          %344 = sbr.rel (%p342) target = $region24
        $region23: #{tpu_custom_call.1} parent=11 // pred_region
          %s346 = ssub.s32 256, 256
          %347 = vsyncadd [#allocation13], %s346
          %s348 = sshll.u32 [#allocation12], 4
          %s349 = int_to_ptr.vmem [resolvable:$true] %s348
          %354 = dma.hbm_to_vmem [thread:$0]  %s5, 256, %s349, [#allocation13], 64, 64, 4
        $region24: #{tpu_custom_call.1} parent=11 // pred_fallthru
          _
        // Predicated region
        $region25: #{tpu_custom_call.1} parent=11 // pred_check
          %p355 = pneg %p191
        $region26: #{tpu_custom_call.1} parent=11 // pred_check_branch
          %357 = sbr.rel (%p355) target = $region28
        $region27: #{tpu_custom_call.1} parent=11 // pred_region
          %s359 = ssub.s32 16, 16
          %360 = vsyncadd [#allocation13], %s359
          %s362 = sshll.u32 [#allocation14], 4
          %s363 = int_to_ptr.vmem [resolvable:$true] %s362
          %365 = dma.hbm_to_vmem [thread:$0]  %s6, 16, %s363, [#allocation13]
        $region28: #{tpu_custom_call.1} parent=11 // pred_fallthru
          _
        // Predicated region
        $region29: #{tpu_custom_call.1} parent=11 // pred_check
          %p366 = pneg %p212
        $region30: #{tpu_custom_call.1} parent=11 // pred_check_branch
          %368 = sbr.rel (%p366) target = $region32
        $region31: #{tpu_custom_call.1} parent=11 // pred_region
          %s370 = ssub.s32 16, 16
          %371 = vsyncadd [#allocation16], %s370
          %s373 = sshll.u32 [#allocation15], 4
          %s374 = int_to_ptr.vmem [resolvable:$true] %s373
          %376 = dma.hbm_to_vmem [thread:$0]  %s7, 16, %s374, [#allocation16]
        $region32: #{tpu_custom_call.1} parent=11 // pred_fallthru
          _
        // Predicated region
        $region33: #{tpu_custom_call.1} parent=11 // pred_check
          %p377 = pneg %p233
        $region34: #{tpu_custom_call.1} parent=11 // pred_check_branch
          %379 = sbr.rel (%p377) target = $region36
        $region35: #{tpu_custom_call.1} parent=11 // pred_region
          %s381 = ssub.s32 16, 16
          %382 = vsyncadd [#allocation16], %s381
          %s384 = sshll.u32 [#allocation17], 4
          %s385 = int_to_ptr.vmem [resolvable:$true] %s384
          %387 = dma.hbm_to_vmem [thread:$0]  %s8, 16, %s385, [#allocation16]
        $region36: #{tpu_custom_call.1} parent=11 // pred_fallthru
          _
        // Predicated region
        $region37: #{tpu_custom_call.1} parent=11 // pred_check
          %p388 = pneg %p254
        $region38: #{tpu_custom_call.1} parent=11 // pred_check_branch
          %390 = sbr.rel (%p388) target = $region40
        $region39: #{tpu_custom_call.1} parent=11 // pred_region
          _
        $region40: #{tpu_custom_call.1} parent=11 // pred_fallthru
          _
        // Predicated region
        $region41: #{tpu_custom_call.1} parent=11 // pred_check
          %p391 = pneg %p275
        $region42: #{tpu_custom_call.1} parent=11 // pred_check_branch
          %393 = sbr.rel (%p391) target = $region44
        $region43: #{tpu_custom_call.1} parent=11 // pred_region
          _
        $region44: #{tpu_custom_call.1} parent=11 // pred_fallthru
          _
      $region12: #{tpu_custom_call.1} parent=5 // pred_fallthru
        _
      %p394 = scmp.lt.s32.totalorder %s29, 2
      // Predicated region
      $region45: #{tpu_custom_call.1} parent=5 // pred_check
        %p395 = pneg %p394
      $region46: #{tpu_custom_call.1} parent=5 // pred_check_branch
        %397 = sbr.rel (%p395) target = $region48
      $region47: #{tpu_custom_call.1} parent=5 // pred_region
        // Predicated region
        $region49: #{tpu_custom_call.1} parent=47 // pred_check
          %p398 = pneg %p49
        $region50: #{tpu_custom_call.1} parent=47 // pred_check_branch
          %400 = sbr.rel (%p398) target = $region52
        $region51: #{tpu_custom_call.1} parent=47 // pred_region
          %s401 = sand.u32 %s39, 1
          %s402 = scalar_lea.sflag [#allocation4], %s401
          %s403 = sand.u32 %s39, 1
          %s404 = smul.addr %s403, 4
          %s405 = scalar_lea.vmem [#allocation3], %s404
          %s407 = ssub.s32 64, 64
          %408 = vsyncadd %s402, %s407
          %s409 = smul.addr %s29, 64
          %s410 = scalar_lea.hbm %s0, %s409
          %s412 = sshll.u32 %s405, 4
          %s413 = int_to_ptr.vmem [resolvable:$true] %s412
          %415 = dma.hbm_to_vmem [thread:$0]  %s410, 64, %s413, %s402
        $region52: #{tpu_custom_call.1} parent=47 // pred_fallthru
          _
        // Predicated region
        $region53: #{tpu_custom_call.1} parent=47 // pred_check
          %p416 = pneg %p75
        $region54: #{tpu_custom_call.1} parent=47 // pred_check_branch
          %418 = sbr.rel (%p416) target = $region56
        $region55: #{tpu_custom_call.1} parent=47 // pred_region
          %s419 = sand.u32 %s29, 1
          %s420 = scalar_lea.sflag [#allocation7], %s419
          %s421 = sand.u32 %s65, 1
          %s422 = smul.addr %s421, 4
          %s423 = scalar_lea.vmem [#allocation6], %s422
          %s425 = ssub.s32 64, 64
          %426 = vsyncadd %s420, %s425
          %s427 = smul.addr %s29, 64
          %s428 = scalar_lea.hbm %s1, %s427
          %s430 = sshll.u32 %s423, 4
          %s431 = int_to_ptr.vmem [resolvable:$true] %s430
          %433 = dma.hbm_to_vmem [thread:$0]  %s428, 64, %s431, %s420
        $region56: #{tpu_custom_call.1} parent=47 // pred_fallthru
          _
        // Predicated region
        $region57: #{tpu_custom_call.1} parent=47 // pred_check
          %p434 = pneg %p101
        $region58: #{tpu_custom_call.1} parent=47 // pred_check_branch
          %436 = sbr.rel (%p434) target = $region60
        $region59: #{tpu_custom_call.1} parent=47 // pred_region
          %s437 = sand.u32 %s29, 1
          %s438 = scalar_lea.sflag [#allocation7], %s437
          %s439 = sand.u32 %s91, 1
          %s440 = smul.addr %s439, 4
          %s441 = scalar_lea.vmem [#allocation8], %s440
          %s443 = ssub.s32 64, 64
          %444 = vsyncadd %s438, %s443
          %s445 = smul.addr %s29, 64
          %s446 = scalar_lea.hbm %s2, %s445
          %s448 = sshll.u32 %s441, 4
          %s449 = int_to_ptr.vmem [resolvable:$true] %s448
          %451 = dma.hbm_to_vmem [thread:$0]  %s446, 64, %s449, %s438
        $region60: #{tpu_custom_call.1} parent=47 // pred_fallthru
          _
      $region48: #{tpu_custom_call.1} parent=5 // pred_fallthru
        _
      %p452 = scmp.le.s32.totalorder 1, %s29
      %p453 = scmp.lt.s32.totalorder %s29, 3
      %p454 = pnand %p452, %p453
      %p455 = pneg %p454
      // Predicated region
      $region61: #{tpu_custom_call.1} parent=5 // pred_check
        _
      $region62: #{tpu_custom_call.1} parent=5 // pred_check_branch
        %457 = sbr.rel (%p454) target = $region64
      $region63: #{tpu_custom_call.1} parent=5 // pred_region
        %s458 = ssub.s32 %s29, 1
        %s459 = sand.u32 %s42, 1
        %s460 = scalar_lea.sflag [#allocation4], %s459
        %s461 = sand.u32 %s42, 1
        %s462 = smul.addr %s461, 4
        %s463 = scalar_lea.vmem [#allocation3], %s462
        // Predicated region
        $region65: #{tpu_custom_call.1} parent=63 // pred_check
          %p464 = pneg %p55
        $region66: #{tpu_custom_call.1} parent=63 // pred_check_branch
          %466 = sbr.rel (%p464) target = $region68
        $region67: #{tpu_custom_call.1} parent=63 // pred_region
          %467 = dma.done %s460, 64
        $region68: #{tpu_custom_call.1} parent=63 // pred_fallthru
          _
        %s468 = sand.u32 %s34, 1
        %s469 = scalar_lea.sflag [#allocation7], %s468
        %s470 = sand.u32 %s68, 1
        %s471 = smul.addr %s470, 4
        %s472 = scalar_lea.vmem [#allocation6], %s471
        // Predicated region
        $region69: #{tpu_custom_call.1} parent=63 // pred_check
          %p473 = pneg %p81
        $region70: #{tpu_custom_call.1} parent=63 // pred_check_branch
          %475 = sbr.rel (%p473) target = $region72
        $region71: #{tpu_custom_call.1} parent=63 // pred_region
          %476 = dma.done %s469, 64
        $region72: #{tpu_custom_call.1} parent=63 // pred_fallthru
          _
        %s477 = sand.u32 %s34, 1
        %s478 = scalar_lea.sflag [#allocation7], %s477
        %s479 = sand.u32 %s94, 1
        %s480 = smul.addr %s479, 4
        %s481 = scalar_lea.vmem [#allocation8], %s480
        // Predicated region
        $region73: #{tpu_custom_call.1} parent=63 // pred_check
          %p482 = pneg %p107
        $region74: #{tpu_custom_call.1} parent=63 // pred_check_branch
          %484 = sbr.rel (%p482) target = $region76
        $region75: #{tpu_custom_call.1} parent=63 // pred_region
          %485 = dma.done %s478, 64
        $region76: #{tpu_custom_call.1} parent=63 // pred_fallthru
          _
        // Predicated region
        $region77: #{tpu_custom_call.1} parent=63 // pred_check
          %p486 = pneg %p128
        $region78: #{tpu_custom_call.1} parent=63 // pred_check_branch
          %488 = sbr.rel (%p486) target = $region80
        $region79: #{tpu_custom_call.1} parent=63 // pred_region
          %489 = dma.done [#allocation10], 256
        $region80: #{tpu_custom_call.1} parent=63 // pred_fallthru
          _
        // Predicated region
        $region81: #{tpu_custom_call.1} parent=63 // pred_check
          %p490 = pneg %p149
        $region82: #{tpu_custom_call.1} parent=63 // pred_check_branch
          %492 = sbr.rel (%p490) target = $region84
        $region83: #{tpu_custom_call.1} parent=63 // pred_region
          %493 = dma.done [#allocation10], 256
        $region84: #{tpu_custom_call.1} parent=63 // pred_fallthru
          _
        // Predicated region
        $region85: #{tpu_custom_call.1} parent=63 // pred_check
          %p494 = pneg %p170
        $region86: #{tpu_custom_call.1} parent=63 // pred_check_branch
          %496 = sbr.rel (%p494) target = $region88
        $region87: #{tpu_custom_call.1} parent=63 // pred_region
          %497 = dma.done [#allocation13], 256
        $region88: #{tpu_custom_call.1} parent=63 // pred_fallthru
          _
        // Predicated region
        $region89: #{tpu_custom_call.1} parent=63 // pred_check
          %p498 = pneg %p191
        $region90: #{tpu_custom_call.1} parent=63 // pred_check_branch
          %500 = sbr.rel (%p498) target = $region92
        $region91: #{tpu_custom_call.1} parent=63 // pred_region
          %501 = dma.done [#allocation13], 16
        $region92: #{tpu_custom_call.1} parent=63 // pred_fallthru
          _
        // Predicated region
        $region93: #{tpu_custom_call.1} parent=63 // pred_check
          %p502 = pneg %p212
        $region94: #{tpu_custom_call.1} parent=63 // pred_check_branch
          %504 = sbr.rel (%p502) target = $region96
        $region95: #{tpu_custom_call.1} parent=63 // pred_region
          %505 = dma.done [#allocation16], 16
        $region96: #{tpu_custom_call.1} parent=63 // pred_fallthru
          _
        // Predicated region
        $region97: #{tpu_custom_call.1} parent=63 // pred_check
          %p506 = pneg %p233
        $region98: #{tpu_custom_call.1} parent=63 // pred_check_branch
          %508 = sbr.rel (%p506) target = $region100
        $region99: #{tpu_custom_call.1} parent=63 // pred_region
          %509 = dma.done [#allocation16], 16
        $region100: #{tpu_custom_call.1} parent=63 // pred_fallthru
          _
        %s510 = sand.u32 %s42, 1
        %s511 = scalar_lea.sflag [#allocation4], %s510
        %s512 = sand.u32 %s42, 1
        %s513 = smul.addr %s512, 4
        %s514 = scalar_lea.vmem [#allocation3], %s513
        %p515 = pneg %p55
        %p516 = pneg %p52
        %s517 = sand.u32 %s34, 1
        %s518 = scalar_lea.sflag [#allocation7], %s517
        %s519 = sand.u32 %s68, 1
        %s520 = smul.addr %s519, 4
        %s521 = scalar_lea.vmem [#allocation6], %s520
        %p522 = pneg %p81
        %p523 = pneg %p78
        %s524 = sand.u32 %s34, 1
        %s525 = scalar_lea.sflag [#allocation7], %s524
        %s526 = sand.u32 %s94, 1
        %s527 = smul.addr %s526, 4
        %s528 = scalar_lea.vmem [#allocation8], %s527
        %p529 = pneg %p107
        %p530 = pneg %p104
        %p531 = pneg %p128
        %p532 = pneg %p125
        %p533 = pneg %p149
        %p534 = pneg %p146
        %p535 = pneg %p170
        %p536 = pneg %p167
        %p537 = pneg %p191
        %p538 = pneg %p188
        %p539 = pneg %p212
        %p540 = pneg %p209
        %p541 = pneg %p233
        %p542 = pneg %p230
        %p543 = pneg %p254
        %p544 = pneg %p251
        %p545 = pneg %p275
        %p546 = pneg %p272
        %p547 = pneg %p301
        %p548 = pneg %p298
        %s549 = sand.u32 %s288, 1
        %s550 = scalar_lea.sflag [#allocation5], %s549
        %s551 = sand.u32 %s288, 1
        %s552 = smul.addr %s551, 8
        %s553 = scalar_lea.vmem [#allocation18], %s552
        %v555 = vld [vmem:[%s463] sm:$0xf]
        %v556 = vld [vmem:[#allocation9] sm:$0xf]
        %v557 = vld [vmem:[#allocation9 + $0x4] sm:$0xf]
        %v558 = vld [vmem:[#allocation9 + $0x8] sm:$0xf]
        %v559 = vld [vmem:[#allocation9 + $0xc] sm:$0xf]
        %v560 = vld [vmem:[#allocation14] sm:$0x1]
        %v562 = vlaneseq
        %v563 = vshrl.u32 %v562, 7
        %v564 = vsub.s32 0, %v563
        %v565 = vrot.slane %v560, %v564
        %v571 = vunpack.c.l.b16 %v556
        %v572 = vunpack.c.l.b16 %v557
        %v573 = vunpack.c.l.b16 %v558
        %v574 = vunpack.c.l.b16 %v559
        %v575 = vpack.c.b16 %v572, %v571
        %v576 = vpack.c.b16 %v574, %v573
        %vm579 = vcmask 261120
        %v581 = vsel %vm579, %v555, 0
        %583 = vmatprep.subr.bf16.mxu0 0
        %584 = vmatpush1.bf16.msra.mxu0 0
        %585 = vmatprep.subr.bf16.mxu0 0
        %586 = vmatpush1.bf16.msra.mxu0 0
        %587 = vmatprep.subr.bf16.mxu0 0
        %588 = vmatpush1.bf16.msra.mxu0 0
        %589 = vmatprep.subr.bf16.mxu0 0
        %590 = vmatpush1.bf16.msra.mxu0 0
        %591 = vmatprep.subr.bf16.mxu0 0
        %592 = vmatpush1.bf16.msra.mxu0 0
        %593 = vmatprep.subr.bf16.mxu0 0
        %594 = vmatpush1.bf16.msra.mxu0 0
        %595 = vmatprep.subr.bf16.mxu0 0
        %596 = vmatpush1.bf16.msra.mxu0 %v576
        %597 = vmatprep.subr.bf16.mxu0 0
        %598 = vmatpush1.bf16.msra.mxu0 %v575
        %599 = vmatprep.subr.bf16.mxu0 0
        %600 = vmatpush2.bf16.msra.mxu0 0
        %601 = vmatprep.subr.bf16.mxu0 0
        %602 = vmatpush2.bf16.msra.mxu0 0
        %603 = vmatprep.subr.bf16.mxu0 0
        %604 = vmatpush2.bf16.msra.mxu0 0
        %605 = vmatprep.subr.bf16.mxu0 0
        %606 = vmatpush2.bf16.msra.mxu0 0
        %607 = vmatprep.subr.bf16.mxu0 0
        %608 = vmatpush2.bf16.msra.mxu0 0
        %609 = vmatprep.subr.bf16.mxu0 0
        %610 = vmatpush2.bf16.msra.mxu0 0
        %611 = vmatprep.subr.bf16.mxu0 0
        %612 = vmatpush2.bf16.msra.mxu0 0
        %613 = vmatprep.subr.bf16.mxu0 0
        %614 = vmatpush2.bf16.msra.mxu0 0
        %615 = vmatprep.mubr.bf16.mxu0 0
        %616 = vmatmul.mubr.bf16.gmra.mxu0 %v581
        %v617 = vpop.f32.mrf.mxu0
        %v618 = vadd.f32 %v565, %v617
        %v619 = vpop.f32.mrf.mxu0
        %v620 = vpop.f32.mrf.mxu0
        %v621 = vpop.f32.mrf.mxu0
        %622 = vdwg.mxu0
        %v623 = vld [vmem:[%s472] sm:$0xf]
        %v624 = vld [vmem:[#allocation11] sm:$0xf]
        %v625 = vld [vmem:[#allocation11 + $0x4] sm:$0xf]
        %v626 = vld [vmem:[#allocation11 + $0x8] sm:$0xf]
        %v627 = vld [vmem:[#allocation11 + $0xc] sm:$0xf]
        %v628 = vld [vmem:[#allocation15] sm:$0x1]
        %v630 = vlaneseq
        %v631 = vshrl.u32 %v630, 7
        %v632 = vsub.s32 0, %v631
        %v633 = vrot.slane %v628, %v632
        %v639 = vunpack.c.l.b16 %v624
        %v640 = vunpack.c.l.b16 %v625
        %v641 = vunpack.c.l.b16 %v626
        %v642 = vunpack.c.l.b16 %v627
        %v643 = vpack.c.b16 %v640, %v639
        %v644 = vpack.c.b16 %v642, %v641
        %v648 = vsel %vm579, %v623, 0
        %650 = vmatprep.subr.bf16.mxu0 0
        %651 = vmatpush1.bf16.msra.mxu0 0
        %652 = vmatprep.subr.bf16.mxu0 0
        %653 = vmatpush1.bf16.msra.mxu0 0
        %654 = vmatprep.subr.bf16.mxu0 0
        %655 = vmatpush1.bf16.msra.mxu0 0
        %656 = vmatprep.subr.bf16.mxu0 0
        %657 = vmatpush1.bf16.msra.mxu0 0
        %658 = vmatprep.subr.bf16.mxu0 0
        %659 = vmatpush1.bf16.msra.mxu0 0
        %660 = vmatprep.subr.bf16.mxu0 0
        %661 = vmatpush1.bf16.msra.mxu0 0
        %662 = vmatprep.subr.bf16.mxu0 0
        %663 = vmatpush1.bf16.msra.mxu0 %v644
        %664 = vmatprep.subr.bf16.mxu0 0
        %665 = vmatpush1.bf16.msra.mxu0 %v643
        %666 = vmatprep.subr.bf16.mxu0 0
        %667 = vmatpush2.bf16.msra.mxu0 0
        %668 = vmatprep.subr.bf16.mxu0 0
        %669 = vmatpush2.bf16.msra.mxu0 0
        %670 = vmatprep.subr.bf16.mxu0 0
        %671 = vmatpush2.bf16.msra.mxu0 0
        %672 = vmatprep.subr.bf16.mxu0 0
        %673 = vmatpush2.bf16.msra.mxu0 0
        %674 = vmatprep.subr.bf16.mxu0 0
        %675 = vmatpush2.bf16.msra.mxu0 0
        %676 = vmatprep.subr.bf16.mxu0 0
        %677 = vmatpush2.bf16.msra.mxu0 0
        %678 = vmatprep.subr.bf16.mxu0 0
        %679 = vmatpush2.bf16.msra.mxu0 0
        %680 = vmatprep.subr.bf16.mxu0 0
        %681 = vmatpush2.bf16.msra.mxu0 0
        %682 = vmatprep.mubr.bf16.mxu0 0
        %683 = vmatmul.mubr.bf16.gmra.mxu0 %v648
        %v684 = vpop.f32.mrf.mxu0
        %v685 = vadd.f32 %v633, %v684
        %v686 = vpop.f32.mrf.mxu0
        %v687 = vpop.f32.mrf.mxu0
        %v688 = vpop.f32.mrf.mxu0
        %689 = vdwg.mxu0
        %v690 = vld [vmem:[%s481] sm:$0xf]
        %v691 = vld [vmem:[#allocation12] sm:$0xf]
        %v692 = vld [vmem:[#allocation12 + $0x4] sm:$0xf]
        %v693 = vld [vmem:[#allocation12 + $0x8] sm:$0xf]
        %v694 = vld [vmem:[#allocation12 + $0xc] sm:$0xf]
        %v695 = vld [vmem:[#allocation17] sm:$0x1]
        %v697 = vlaneseq
        %v698 = vshrl.u32 %v697, 7
        %v699 = vsub.s32 0, %v698
        %v700 = vrot.slane %v695, %v699
        %v706 = vunpack.c.l.b16 %v691
        %v707 = vunpack.c.l.b16 %v692
        %v708 = vunpack.c.l.b16 %v693
        %v709 = vunpack.c.l.b16 %v694
        %v710 = vpack.c.b16 %v707, %v706
        %v711 = vpack.c.b16 %v709, %v708
        %v715 = vsel %vm579, %v690, 0
        %717 = vmatprep.subr.bf16.mxu0 0
        %718 = vmatpush1.bf16.msra.mxu0 0
        %719 = vmatprep.subr.bf16.mxu0 0
        %720 = vmatpush1.bf16.msra.mxu0 0
        %721 = vmatprep.subr.bf16.mxu0 0
        %722 = vmatpush1.bf16.msra.mxu0 0
        %723 = vmatprep.subr.bf16.mxu0 0
        %724 = vmatpush1.bf16.msra.mxu0 0
        %725 = vmatprep.subr.bf16.mxu0 0
        %726 = vmatpush1.bf16.msra.mxu0 0
        %727 = vmatprep.subr.bf16.mxu0 0
        %728 = vmatpush1.bf16.msra.mxu0 0
        %729 = vmatprep.subr.bf16.mxu0 0
        %730 = vmatpush1.bf16.msra.mxu0 %v711
        %731 = vmatprep.subr.bf16.mxu0 0
        %732 = vmatpush1.bf16.msra.mxu0 %v710
        %733 = vmatprep.subr.bf16.mxu0 0
        %734 = vmatpush2.bf16.msra.mxu0 0
        %735 = vmatprep.subr.bf16.mxu0 0
        %736 = vmatpush2.bf16.msra.mxu0 0
        %737 = vmatprep.subr.bf16.mxu0 0
        %738 = vmatpush2.bf16.msra.mxu0 0
        %739 = vmatprep.subr.bf16.mxu0 0
        %740 = vmatpush2.bf16.msra.mxu0 0
        %741 = vmatprep.subr.bf16.mxu0 0
        %742 = vmatpush2.bf16.msra.mxu0 0
        %743 = vmatprep.subr.bf16.mxu0 0
        %744 = vmatpush2.bf16.msra.mxu0 0
        %745 = vmatprep.subr.bf16.mxu0 0
        %746 = vmatpush2.bf16.msra.mxu0 0
        %747 = vmatprep.subr.bf16.mxu0 0
        %748 = vmatpush2.bf16.msra.mxu0 0
        %749 = vmatprep.mubr.bf16.mxu0 0
        %750 = vmatmul.mubr.bf16.gmra.mxu0 %v715
        %v751 = vpop.f32.mrf.mxu0
        %v752 = vadd.f32 %v700, %v751
        %v753 = vpop.f32.mrf.mxu0
        %v754 = vpop.f32.mrf.mxu0
        %v755 = vpop.f32.mrf.mxu0
        %756 = vdwg.mxu0
        %v757 = vpack.c.bf16 %v618, %v618
        %v758 = vpack.c.bf16 %v685, %v685
        %v759 = vpack.c.bf16 %v752, %v752
        %vm760 = vcmask 64512
        %v762 = vsel %vm760, %v757, 0
        %v765 = vsel %vm760, %v758, 0
        %767 = vmatprep.subr.bf16.mxu0 0
        %768 = vmatpush1.bf16.xpose.msra.mxu0 0
        %769 = vmatprep.subr.bf16.mxu0 0
        %770 = vmatpush1.bf16.xpose.msra.mxu0 0
        %771 = vmatprep.subr.bf16.mxu0 0
        %772 = vmatpush1.bf16.xpose.msra.mxu0 0
        %773 = vmatprep.subr.bf16.mxu0 0
        %774 = vmatpush1.bf16.xpose.msra.mxu0 0
        %775 = vmatprep.subr.bf16.mxu0 0
        %776 = vmatpush1.bf16.xpose.msra.mxu0 0
        %777 = vmatprep.subr.bf16.mxu0 0
        %778 = vmatpush1.bf16.xpose.msra.mxu0 0
        %779 = vmatprep.subr.bf16.mxu0 0
        %780 = vmatpush1.bf16.xpose.msra.mxu0 0
        %781 = vmatprep.subr.bf16.mxu0 0
        %782 = vmatpush1.bf16.xpose.msra.mxu0 %v765
        %783 = vmatprep.subr.bf16.mxu0 0
        %784 = vmatpush2.bf16.xpose.msra.mxu0 0
        %785 = vmatprep.subr.bf16.mxu0 0
        %786 = vmatpush2.bf16.xpose.msra.mxu0 0
        %787 = vmatprep.subr.bf16.mxu0 0
        %788 = vmatpush2.bf16.xpose.msra.mxu0 0
        %789 = vmatprep.subr.bf16.mxu0 0
        %790 = vmatpush2.bf16.xpose.msra.mxu0 0
        %791 = vmatprep.subr.bf16.mxu0 0
        %792 = vmatpush2.bf16.xpose.msra.mxu0 0
        %793 = vmatprep.subr.bf16.mxu0 0
        %794 = vmatpush2.bf16.xpose.msra.mxu0 0
        %795 = vmatprep.subr.bf16.mxu0 0
        %796 = vmatpush2.bf16.xpose.msra.mxu0 0
        %797 = vmatprep.subr.bf16.mxu0 0
        %798 = vmatpush2.bf16.xpose.msra.mxu0 0
        %799 = vmatprep.mubr.bf16.mxu0 0
        %800 = vmatmul.mubr.bf16.gmra.mxu0 %v762
        %v801 = vpop.f32.mrf.mxu0
        %v802 = vadd.f32 0.0, %v801
        %v803 = vpop.f32.mrf.mxu0
        %v804 = vpop.f32.mrf.mxu0
        %v805 = vpop.f32.mrf.mxu0
        %806 = vdwg.mxu0
        %v807 = vsel %vm760, %v802, -inf
        %808 = vmax.xlane.f32.xlu0 %v807
        %v809 = vpop.xlane.xlu0 %808
        %v810 = vsub.f32 %v802, %v809
        %v811 = vmul.f32 %v810, 1.442695
        %v812 = vpow.pop %v811
        %v813 = vsel %vm760, %v812, 0.0
        %814 = vadd.xlane.f32.xlu0 %v813
        %v815 = vpop.xlane.xlu0 %814
        %v816 = vrcp.pop %v815
        %v817 = vmul.f32 %v812, %v816
        %v818 = vpack.c.bf16 %v817, %v817
        %v820 = vsel %vm760, %v818, 0
        %vm822 = vcmask 1043456
        %v824 = vsel %vm822, %v759, 0
        %826 = vmatprep.subr.bf16.mxu0 0
        %827 = vmatpush1.bf16.msra.mxu0 0
        %828 = vmatprep.subr.bf16.mxu0 0
        %829 = vmatpush1.bf16.msra.mxu0 0
        %830 = vmatprep.subr.bf16.mxu0 0
        %831 = vmatpush1.bf16.msra.mxu0 0
        %832 = vmatprep.subr.bf16.mxu0 0
        %833 = vmatpush1.bf16.msra.mxu0 0
        %834 = vmatprep.subr.bf16.mxu0 0
        %835 = vmatpush1.bf16.msra.mxu0 0
        %836 = vmatprep.subr.bf16.mxu0 0
        %837 = vmatpush1.bf16.msra.mxu0 0
        %838 = vmatprep.subr.bf16.mxu0 0
        %839 = vmatpush1.bf16.msra.mxu0 0
        %840 = vmatprep.subr.bf16.mxu0 0
        %841 = vmatpush1.bf16.msra.mxu0 %v824
        %842 = vmatprep.subr.bf16.mxu0 0
        %843 = vmatpush2.bf16.msra.mxu0 0
        %844 = vmatprep.subr.bf16.mxu0 0
        %845 = vmatpush2.bf16.msra.mxu0 0
        %846 = vmatprep.subr.bf16.mxu0 0
        %847 = vmatpush2.bf16.msra.mxu0 0
        %848 = vmatprep.subr.bf16.mxu0 0
        %849 = vmatpush2.bf16.msra.mxu0 0
        %850 = vmatprep.subr.bf16.mxu0 0
        %851 = vmatpush2.bf16.msra.mxu0 0
        %852 = vmatprep.subr.bf16.mxu0 0
        %853 = vmatpush2.bf16.msra.mxu0 0
        %854 = vmatprep.subr.bf16.mxu0 0
        %855 = vmatpush2.bf16.msra.mxu0 0
        %856 = vmatprep.subr.bf16.mxu0 0
        %857 = vmatpush2.bf16.msra.mxu0 0
        %858 = vmatprep.mubr.bf16.mxu0 0
        %859 = vmatmul.mubr.bf16.gmra.mxu0 %v820
        %v860 = vpop.f32.mrf.mxu0
        %v861 = vadd.f32 0.0, %v860
        %v862 = vpop.f32.mrf.mxu0
        %v863 = vpop.f32.mrf.mxu0
        %v864 = vpop.f32.mrf.mxu0
        %865 = vdwg.mxu0
        %v866 = vpack.c.bf16 %v861, %v861
        %vm867 = vcmask 60416
        %868 = vst.msk [vmem:[#allocation2] sm:$0xf] %vm867, %v866
        %870 = vrot.lane.b32.xlu0 %v757, 120
        %v871 = vpop.permute.xlu0 %870
        %873 = vrot.lane.b32.xlu0 %v758, 120
        %v874 = vpop.permute.xlu0 %873
        %v876 = vsel %vm760, %v871, 0
        %v879 = vsel %vm760, %v874, 0
        %881 = vmatprep.subr.bf16.mxu0 0
        %882 = vmatpush1.bf16.xpose.msra.mxu0 0
        %883 = vmatprep.subr.bf16.mxu0 0
        %884 = vmatpush1.bf16.xpose.msra.mxu0 0
        %885 = vmatprep.subr.bf16.mxu0 0
        %886 = vmatpush1.bf16.xpose.msra.mxu0 0
        %887 = vmatprep.subr.bf16.mxu0 0
        %888 = vmatpush1.bf16.xpose.msra.mxu0 0
        %889 = vmatprep.subr.bf16.mxu0 0
        %890 = vmatpush1.bf16.xpose.msra.mxu0 0
        %891 = vmatprep.subr.bf16.mxu0 0
        %892 = vmatpush1.bf16.xpose.msra.mxu0 0
        %893 = vmatprep.subr.bf16.mxu0 0
        %894 = vmatpush1.bf16.xpose.msra.mxu0 0
        %895 = vmatprep.subr.bf16.mxu0 0
        %896 = vmatpush1.bf16.xpose.msra.mxu0 %v879
        %897 = vmatprep.subr.bf16.mxu0 0
        %898 = vmatpush2.bf16.xpose.msra.mxu0 0
        %899 = vmatprep.subr.bf16.mxu0 0
        %900 = vmatpush2.bf16.xpose.msra.mxu0 0
        %901 = vmatprep.subr.bf16.mxu0 0
        %902 = vmatpush2.bf16.xpose.msra.mxu0 0
        %903 = vmatprep.subr.bf16.mxu0 0
        %904 = vmatpush2.bf16.xpose.msra.mxu0 0
        %905 = vmatprep.subr.bf16.mxu0 0
        %906 = vmatpush2.bf16.xpose.msra.mxu0 0
        %907 = vmatprep.subr.bf16.mxu0 0
        %908 = vmatpush2.bf16.xpose.msra.mxu0 0
        %909 = vmatprep.subr.bf16.mxu0 0
        %910 = vmatpush2.bf16.xpose.msra.mxu0 0
        %911 = vmatprep.subr.bf16.mxu0 0
        %912 = vmatpush2.bf16.xpose.msra.mxu0 0
        %913 = vmatprep.mubr.bf16.mxu0 0
        %914 = vmatmul.mubr.bf16.gmra.mxu0 %v876
        %v915 = vpop.f32.mrf.mxu0
        %v916 = vadd.f32 0.0, %v915
        %v917 = vpop.f32.mrf.mxu0
        %v918 = vpop.f32.mrf.mxu0
        %v919 = vpop.f32.mrf.mxu0
        %920 = vdwg.mxu0
        %v921 = vsel %vm760, %v916, -inf
        %922 = vmax.xlane.f32.xlu0 %v921
        %v923 = vpop.xlane.xlu0 %922
        %v924 = vsub.f32 %v916, %v923
        %v925 = vmul.f32 %v924, 1.442695
        %v926 = vpow.pop %v925
        %v927 = vsel %vm760, %v926, 0.0
        %928 = vadd.xlane.f32.xlu0 %v927
        %v929 = vpop.xlane.xlu0 %928
        %v930 = vrcp.pop %v929
        %v931 = vmul.f32 %v926, %v930
        %v932 = vpack.c.bf16 %v931, %v931
        %934 = vrot.lane.b32.xlu0 %v759, 120
        %v935 = vpop.permute.xlu0 %934
        %v937 = vsel %vm760, %v932, 0
        %v940 = vsel %vm822, %v935, 0
        %942 = vmatprep.subr.bf16.mxu0 0
        %943 = vmatpush1.bf16.msra.mxu0 0
        %944 = vmatprep.subr.bf16.mxu0 0
        %945 = vmatpush1.bf16.msra.mxu0 0
        %946 = vmatprep.subr.bf16.mxu0 0
        %947 = vmatpush1.bf16.msra.mxu0 0
        %948 = vmatprep.subr.bf16.mxu0 0
        %949 = vmatpush1.bf16.msra.mxu0 0
        %950 = vmatprep.subr.bf16.mxu0 0
        %951 = vmatpush1.bf16.msra.mxu0 0
        %952 = vmatprep.subr.bf16.mxu0 0
        %953 = vmatpush1.bf16.msra.mxu0 0
        %954 = vmatprep.subr.bf16.mxu0 0
        %955 = vmatpush1.bf16.msra.mxu0 0
        %956 = vmatprep.subr.bf16.mxu0 0
        %957 = vmatpush1.bf16.msra.mxu0 %v940
        %958 = vmatprep.subr.bf16.mxu0 0
        %959 = vmatpush2.bf16.msra.mxu0 0
        %960 = vmatprep.subr.bf16.mxu0 0
        %961 = vmatpush2.bf16.msra.mxu0 0
        %962 = vmatprep.subr.bf16.mxu0 0
        %963 = vmatpush2.bf16.msra.mxu0 0
        %964 = vmatprep.subr.bf16.mxu0 0
        %965 = vmatpush2.bf16.msra.mxu0 0
        %966 = vmatprep.subr.bf16.mxu0 0
        %967 = vmatpush2.bf16.msra.mxu0 0
        %968 = vmatprep.subr.bf16.mxu0 0
        %969 = vmatpush2.bf16.msra.mxu0 0
        %970 = vmatprep.subr.bf16.mxu0 0
        %971 = vmatpush2.bf16.msra.mxu0 0
        %972 = vmatprep.subr.bf16.mxu0 0
        %973 = vmatpush2.bf16.msra.mxu0 0
        %974 = vmatprep.mubr.bf16.mxu0 0
        %975 = vmatmul.mubr.bf16.gmra.mxu0 %v937
        %v976 = vpop.f32.mrf.mxu0
        %v977 = vadd.f32 0.0, %v976
        %v978 = vpop.f32.mrf.mxu0
        %v979 = vpop.f32.mrf.mxu0
        %v980 = vpop.f32.mrf.mxu0
        %981 = vdwg.mxu0
        %v982 = vpack.c.bf16 %v977, %v977
        %v984 = vunpack.c.l.b16 %v982
        %v985 = vpack.c.b16 %v984, %v984
        %986 = vrot.lane.b32.xlu0 %v985, 8
        %v987 = vpop.permute.xlu0 %986
        %vm989 = vcmask 126016
        %990 = vst.msk [vmem:[#allocation2] sm:$0xf] %vm989, %v987
        %991 = vrot.lane.b32.xlu0 %v757, 112
        %v992 = vpop.permute.xlu0 %991
        %993 = vrot.lane.b32.xlu0 %v758, 112
        %v994 = vpop.permute.xlu0 %993
        %v996 = vsel %vm760, %v992, 0
        %v999 = vsel %vm760, %v994, 0
        %1001 = vmatprep.subr.bf16.mxu0 0
        %1002 = vmatpush1.bf16.xpose.msra.mxu0 0
        %1003 = vmatprep.subr.bf16.mxu0 0
        %1004 = vmatpush1.bf16.xpose.msra.mxu0 0
        %1005 = vmatprep.subr.bf16.mxu0 0
        %1006 = vmatpush1.bf16.xpose.msra.mxu0 0
        %1007 = vmatprep.subr.bf16.mxu0 0
        %1008 = vmatpush1.bf16.xpose.msra.mxu0 0
        %1009 = vmatprep.subr.bf16.mxu0 0
        %1010 = vmatpush1.bf16.xpose.msra.mxu0 0
        %1011 = vmatprep.subr.bf16.mxu0 0
        %1012 = vmatpush1.bf16.xpose.msra.mxu0 0
        %1013 = vmatprep.subr.bf16.mxu0 0
        %1014 = vmatpush1.bf16.xpose.msra.mxu0 0
        %1015 = vmatprep.subr.bf16.mxu0 0
        %1016 = vmatpush1.bf16.xpose.msra.mxu0 %v999
        %1017 = vmatprep.subr.bf16.mxu0 0
        %1018 = vmatpush2.bf16.xpose.msra.mxu0 0
        %1019 = vmatprep.subr.bf16.mxu0 0
        %1020 = vmatpush2.bf16.xpose.msra.mxu0 0
        %1021 = vmatprep.subr.bf16.mxu0 0
        %1022 = vmatpush2.bf16.xpose.msra.mxu0 0
        %1023 = vmatprep.subr.bf16.mxu0 0
        %1024 = vmatpush2.bf16.xpose.msra.mxu0 0
        %1025 = vmatprep.subr.bf16.mxu0 0
        %1026 = vmatpush2.bf16.xpose.msra.mxu0 0
        %1027 = vmatprep.subr.bf16.mxu0 0
        %1028 = vmatpush2.bf16.xpose.msra.mxu0 0
        %1029 = vmatprep.subr.bf16.mxu0 0
        %1030 = vmatpush2.bf16.xpose.msra.mxu0 0
        %1031 = vmatprep.subr.bf16.mxu0 0
        %1032 = vmatpush2.bf16.xpose.msra.mxu0 0
        %1033 = vmatprep.mubr.bf16.mxu0 0
        %1034 = vmatmul.mubr.bf16.gmra.mxu0 %v996
        %v1035 = vpop.f32.mrf.mxu0
        %v1036 = vadd.f32 0.0, %v1035
        %v1037 = vpop.f32.mrf.mxu0
        %v1038 = vpop.f32.mrf.mxu0
        %v1039 = vpop.f32.mrf.mxu0
        %1040 = vdwg.mxu0
        %v1041 = vsel %vm760, %v1036, -inf
        %1042 = vmax.xlane.f32.xlu0 %v1041
        %v1043 = vpop.xlane.xlu0 %1042
        %v1044 = vsub.f32 %v1036, %v1043
        %v1045 = vmul.f32 %v1044, 1.442695
        %v1046 = vpow.pop %v1045
        %v1047 = vsel %vm760, %v1046, 0.0
        %1048 = vadd.xlane.f32.xlu0 %v1047
        %v1049 = vpop.xlane.xlu0 %1048
        %v1050 = vrcp.pop %v1049
        %v1051 = vmul.f32 %v1046, %v1050
        %v1052 = vpack.c.bf16 %v1051, %v1051
        %1053 = vrot.lane.b32.xlu0 %v759, 112
        %v1054 = vpop.permute.xlu0 %1053
        %v1056 = vsel %vm760, %v1052, 0
        %v1059 = vsel %vm822, %v1054, 0
        %1061 = vmatprep.subr.bf16.mxu0 0
        %1062 = vmatpush1.bf16.msra.mxu0 0
        %1063 = vmatprep.subr.bf16.mxu0 0
        %1064 = vmatpush1.bf16.msra.mxu0 0
        %1065 = vmatprep.subr.bf16.mxu0 0
        %1066 = vmatpush1.bf16.msra.mxu0 0
        %1067 = vmatprep.subr.bf16.mxu0 0
        %1068 = vmatpush1.bf16.msra.mxu0 0
        %1069 = vmatprep.subr.bf16.mxu0 0
        %1070 = vmatpush1.bf16.msra.mxu0 0
        %1071 = vmatprep.subr.bf16.mxu0 0
        %1072 = vmatpush1.bf16.msra.mxu0 0
        %1073 = vmatprep.subr.bf16.mxu0 0
        %1074 = vmatpush1.bf16.msra.mxu0 0
        %1075 = vmatprep.subr.bf16.mxu0 0
        %1076 = vmatpush1.bf16.msra.mxu0 %v1059
        %1077 = vmatprep.subr.bf16.mxu0 0
        %1078 = vmatpush2.bf16.msra.mxu0 0
        %1079 = vmatprep.subr.bf16.mxu0 0
        %1080 = vmatpush2.bf16.msra.mxu0 0
        %1081 = vmatprep.subr.bf16.mxu0 0
        %1082 = vmatpush2.bf16.msra.mxu0 0
        %1083 = vmatprep.subr.bf16.mxu0 0
        %1084 = vmatpush2.bf16.msra.mxu0 0
        %1085 = vmatprep.subr.bf16.mxu0 0
        %1086 = vmatpush2.bf16.msra.mxu0 0
        %1087 = vmatprep.subr.bf16.mxu0 0
        %1088 = vmatpush2.bf16.msra.mxu0 0
        %1089 = vmatprep.subr.bf16.mxu0 0
        %1090 = vmatpush2.bf16.msra.mxu0 0
        %1091 = vmatprep.subr.bf16.mxu0 0
        %1092 = vmatpush2.bf16.msra.mxu0 0
        %1093 = vmatprep.mubr.bf16.mxu0 0
        %1094 = vmatmul.mubr.bf16.gmra.mxu0 %v1056
        %v1095 = vpop.f32.mrf.mxu0
        %v1096 = vadd.f32 0.0, %v1095
        %v1097 = vpop.f32.mrf.mxu0
        %v1098 = vpop.f32.mrf.mxu0
        %v1099 = vpop.f32.mrf.mxu0
        %1100 = vdwg.mxu0
        %v1101 = vpack.c.bf16 %v1096, %v1096
        %v1103 = vunpack.c.l.b16 %v1101
        %v1104 = vpack.c.b16 %v1103, %v1103
        %1105 = vrot.lane.b32.xlu0 %v1104, 16
        %v1106 = vpop.permute.xlu0 %1105
        %vm1108 = vcmask 191616
        %1109 = vst.msk [vmem:[#allocation2] sm:$0xf] %vm1108, %v1106
        %1110 = vrot.lane.b32.xlu0 %v757, 104
        %v1111 = vpop.permute.xlu0 %1110
        %1112 = vrot.lane.b32.xlu0 %v758, 104
        %v1113 = vpop.permute.xlu0 %1112
        %v1115 = vsel %vm760, %v1111, 0
        %v1118 = vsel %vm760, %v1113, 0
        %1120 = vmatprep.subr.bf16.mxu0 0
        %1121 = vmatpush1.bf16.xpose.msra.mxu0 0
        %1122 = vmatprep.subr.bf16.mxu0 0
        %1123 = vmatpush1.bf16.xpose.msra.mxu0 0
        %1124 = vmatprep.subr.bf16.mxu0 0
        %1125 = vmatpush1.bf16.xpose.msra.mxu0 0
        %1126 = vmatprep.subr.bf16.mxu0 0
        %1127 = vmatpush1.bf16.xpose.msra.mxu0 0
        %1128 = vmatprep.subr.bf16.mxu0 0
        %1129 = vmatpush1.bf16.xpose.msra.mxu0 0
        %1130 = vmatprep.subr.bf16.mxu0 0
        %1131 = vmatpush1.bf16.xpose.msra.mxu0 0
        %1132 = vmatprep.subr.bf16.mxu0 0
        %1133 = vmatpush1.bf16.xpose.msra.mxu0 0
        %1134 = vmatprep.subr.bf16.mxu0 0
        %1135 = vmatpush1.bf16.xpose.msra.mxu0 %v1118
        %1136 = vmatprep.subr.bf16.mxu0 0
        %1137 = vmatpush2.bf16.xpose.msra.mxu0 0
        %1138 = vmatprep.subr.bf16.mxu0 0
        %1139 = vmatpush2.bf16.xpose.msra.mxu0 0
        %1140 = vmatprep.subr.bf16.mxu0 0
        %1141 = vmatpush2.bf16.xpose.msra.mxu0 0
        %1142 = vmatprep.subr.bf16.mxu0 0
        %1143 = vmatpush2.bf16.xpose.msra.mxu0 0
        %1144 = vmatprep.subr.bf16.mxu0 0
        %1145 = vmatpush2.bf16.xpose.msra.mxu0 0
        %1146 = vmatprep.subr.bf16.mxu0 0
        %1147 = vmatpush2.bf16.xpose.msra.mxu0 0
        %1148 = vmatprep.subr.bf16.mxu0 0
        %1149 = vmatpush2.bf16.xpose.msra.mxu0 0
        %1150 = vmatprep.subr.bf16.mxu0 0
        %1151 = vmatpush2.bf16.xpose.msra.mxu0 0
        %1152 = vmatprep.mubr.bf16.mxu0 0
        %1153 = vmatmul.mubr.bf16.gmra.mxu0 %v1115
        %v1154 = vpop.f32.mrf.mxu0
        %v1155 = vadd.f32 0.0, %v1154
        %v1156 = vpop.f32.mrf.mxu0
        %v1157 = vpop.f32.mrf.mxu0
        %v1158 = vpop.f32.mrf.mxu0
        %1159 = vdwg.mxu0
        %v1160 = vsel %vm760, %v1155, -inf
        %1161 = vmax.xlane.f32.xlu0 %v1160
        %v1162 = vpop.xlane.xlu0 %1161
        %v1163 = vsub.f32 %v1155, %v1162
        %v1164 = vmul.f32 %v1163, 1.442695
        %v1165 = vpow.pop %v1164
        %v1166 = vsel %vm760, %v1165, 0.0
        %1167 = vadd.xlane.f32.xlu0 %v1166
        %v1168 = vpop.xlane.xlu0 %1167
        %v1169 = vrcp.pop %v1168
        %v1170 = vmul.f32 %v1165, %v1169
        %v1171 = vpack.c.bf16 %v1170, %v1170
        %1172 = vrot.lane.b32.xlu0 %v759, 104
        %v1173 = vpop.permute.xlu0 %1172
        %v1175 = vsel %vm760, %v1171, 0
        %v1178 = vsel %vm822, %v1173, 0
        %1180 = vmatprep.subr.bf16.mxu0 0
        %1181 = vmatpush1.bf16.msra.mxu0 0
        %1182 = vmatprep.subr.bf16.mxu0 0
        %1183 = vmatpush1.bf16.msra.mxu0 0
        %1184 = vmatprep.subr.bf16.mxu0 0
        %1185 = vmatpush1.bf16.msra.mxu0 0
        %1186 = vmatprep.subr.bf16.mxu0 0
        %1187 = vmatpush1.bf16.msra.mxu0 0
        %1188 = vmatprep.subr.bf16.mxu0 0
        %1189 = vmatpush1.bf16.msra.mxu0 0
        %1190 = vmatprep.subr.bf16.mxu0 0
        %1191 = vmatpush1.bf16.msra.mxu0 0
        %1192 = vmatprep.subr.bf16.mxu0 0
        %1193 = vmatpush1.bf16.msra.mxu0 0
        %1194 = vmatprep.subr.bf16.mxu0 0
        %1195 = vmatpush1.bf16.msra.mxu0 %v1178
        %1196 = vmatprep.subr.bf16.mxu0 0
        %1197 = vmatpush2.bf16.msra.mxu0 0
        %1198 = vmatprep.subr.bf16.mxu0 0
        %1199 = vmatpush2.bf16.msra.mxu0 0
        %1200 = vmatprep.subr.bf16.mxu0 0
        %1201 = vmatpush2.bf16.msra.mxu0 0
        %1202 = vmatprep.subr.bf16.mxu0 0
        %1203 = vmatpush2.bf16.msra.mxu0 0
        %1204 = vmatprep.subr.bf16.mxu0 0
        %1205 = vmatpush2.bf16.msra.mxu0 0
        %1206 = vmatprep.subr.bf16.mxu0 0
        %1207 = vmatpush2.bf16.msra.mxu0 0
        %1208 = vmatprep.subr.bf16.mxu0 0
        %1209 = vmatpush2.bf16.msra.mxu0 0
        %1210 = vmatprep.subr.bf16.mxu0 0
        %1211 = vmatpush2.bf16.msra.mxu0 0
        %1212 = vmatprep.mubr.bf16.mxu0 0
        %1213 = vmatmul.mubr.bf16.gmra.mxu0 %v1175
        %v1214 = vpop.f32.mrf.mxu0
        %v1215 = vadd.f32 0.0, %v1214
        %v1216 = vpop.f32.mrf.mxu0
        %v1217 = vpop.f32.mrf.mxu0
        %v1218 = vpop.f32.mrf.mxu0
        %1219 = vdwg.mxu0
        %v1220 = vpack.c.bf16 %v1215, %v1215
        %v1222 = vunpack.c.l.b16 %v1220
        %v1223 = vpack.c.b16 %v1222, %v1222
        %1224 = vrot.lane.b32.xlu0 %v1223, 24
        %v1225 = vpop.permute.xlu0 %1224
        %vm1227 = vcmask 257216
        %1228 = vst.msk [vmem:[#allocation2] sm:$0xf] %vm1227, %v1225
        %v1229 = vld [vmem:[#allocation2] sm:$0xf]
        %v1230 = vld [vmem:[%s9] sm:$0xf]
        %v1231 = vld [vmem:[%s9 + $0x4] sm:$0xf]
        %v1232 = vld [vmem:[%s9 + $0x8] sm:$0xf]
        %v1233 = vld [vmem:[%s9 + $0xc] sm:$0xf]
        %v1234 = vld [vmem:[%s10] sm:$0x1]
        %v1236 = vlaneseq
        %v1237 = vshrl.u32 %v1236, 7
        %v1238 = vsub.s32 0, %v1237
        %v1239 = vrot.slane %v1234, %v1238
        %v1245 = vunpack.c.l.b16 %v1230
        %v1246 = vunpack.c.l.b16 %v1231
        %v1247 = vunpack.c.l.b16 %v1232
        %v1248 = vunpack.c.l.b16 %v1233
        %v1249 = vpack.c.b16 %v1246, %v1245
        %v1250 = vpack.c.b16 %v1248, %v1247
        %v1254 = vsel %vm579, %v1229, 0
        %1256 = vmatprep.subr.bf16.mxu0 0
        %1257 = vmatpush1.bf16.msra.mxu0 0
        %1258 = vmatprep.subr.bf16.mxu0 0
        %1259 = vmatpush1.bf16.msra.mxu0 0
        %1260 = vmatprep.subr.bf16.mxu0 0
        %1261 = vmatpush1.bf16.msra.mxu0 0
        %1262 = vmatprep.subr.bf16.mxu0 0
        %1263 = vmatpush1.bf16.msra.mxu0 0
        %1264 = vmatprep.subr.bf16.mxu0 0
        %1265 = vmatpush1.bf16.msra.mxu0 0
        %1266 = vmatprep.subr.bf16.mxu0 0
        %1267 = vmatpush1.bf16.msra.mxu0 0
        %1268 = vmatprep.subr.bf16.mxu0 0
        %1269 = vmatpush1.bf16.msra.mxu0 %v1250
        %1270 = vmatprep.subr.bf16.mxu0 0
        %1271 = vmatpush1.bf16.msra.mxu0 %v1249
        %1272 = vmatprep.subr.bf16.mxu0 0
        %1273 = vmatpush2.bf16.msra.mxu0 0
        %1274 = vmatprep.subr.bf16.mxu0 0
        %1275 = vmatpush2.bf16.msra.mxu0 0
        %1276 = vmatprep.subr.bf16.mxu0 0
        %1277 = vmatpush2.bf16.msra.mxu0 0
        %1278 = vmatprep.subr.bf16.mxu0 0
        %1279 = vmatpush2.bf16.msra.mxu0 0
        %1280 = vmatprep.subr.bf16.mxu0 0
        %1281 = vmatpush2.bf16.msra.mxu0 0
        %1282 = vmatprep.subr.bf16.mxu0 0
        %1283 = vmatpush2.bf16.msra.mxu0 0
        %1284 = vmatprep.subr.bf16.mxu0 0
        %1285 = vmatpush2.bf16.msra.mxu0 0
        %1286 = vmatprep.subr.bf16.mxu0 0
        %1287 = vmatpush2.bf16.msra.mxu0 0
        %1288 = vmatprep.mubr.bf16.mxu0 0
        %1289 = vmatmul.mubr.bf16.gmra.mxu0 %v1254
        %v1290 = vpop.f32.mrf.mxu0
        %v1291 = vadd.f32 %v1239, %v1290
        %v1292 = vpop.f32.mrf.mxu0
        %v1293 = vpop.f32.mrf.mxu0
        %v1294 = vpop.f32.mrf.mxu0
        %1295 = vdwg.mxu0
        %1296 = vst [vmem:[%s553] sm:$0xff] %v1291
        %s1297 = sand.u32 %s288, 1
        %s1298 = scalar_lea.sflag [#allocation5], %s1297
        %s1299 = sand.u32 %s288, 1
        %s1300 = smul.addr %s1299, 8
        %s1301 = scalar_lea.vmem [#allocation18], %s1300
        // Predicated region
        $region101: #{tpu_custom_call.1} parent=63 // pred_check
          %p1302 = pneg %p298
        $region102: #{tpu_custom_call.1} parent=63 // pred_check_branch
          %1304 = sbr.rel (%p1302) target = $region104
        $region103: #{tpu_custom_call.1} parent=63 // pred_region
          %s1306 = ssub.s32 128, 128
          %1307 = vsyncadd %s1298, %s1306
          %s1308 = smul.addr %s34, 128
          %s1309 = scalar_lea.hbm %s11, %s1308
          %s1311 = sshll.u32 %s1301, 4
          %s1312 = int_to_ptr.vmem [resolvable:$true] %s1311
          %1314 = dma.vmem_to_hbm [thread:$0]  %s1312, 128, %s1309, %s1298
        $region104: #{tpu_custom_call.1} parent=63 // pred_fallthru
          _
      $region64: #{tpu_custom_call.1} parent=5 // pred_fallthru
        _
      %p1315 = scmp.le.s32.totalorder 2, %s29
      // Predicated region
      $region105: #{tpu_custom_call.1} parent=5 // pred_check
        %p1316 = pneg %p1315
      $region106: #{tpu_custom_call.1} parent=5 // pred_check_branch
        %1318 = sbr.rel (%p1316) target = $region108
      $region107: #{tpu_custom_call.1} parent=5 // pred_region
        %s1319 = ssub.s32 %s29, 2
        // Predicated region
        $region109: #{tpu_custom_call.1} parent=107 // pred_check
          %p1320 = pneg %p304
        $region110: #{tpu_custom_call.1} parent=107 // pred_check_branch
          %1322 = sbr.rel (%p1320) target = $region112
        $region111: #{tpu_custom_call.1} parent=107 // pred_region
          %s1323 = sand.u32 %s289, 1
          %s1324 = scalar_lea.sflag [#allocation5], %s1323
          %s1325 = sand.u32 %s289, 1
          %s1326 = smul.addr %s1325, 8
          %s1327 = scalar_lea.vmem [#allocation18], %s1326
          %1328 = dma.done %s1324, 128
        $region112: #{tpu_custom_call.1} parent=107 // pred_fallthru
          _
      $region108: #{tpu_custom_call.1} parent=5 // pred_fallthru
        _
    $region6: #{tpu_custom_call.1} parent=1 // loop_footer
      %s33 = sadd.s32 1, %s29
    $region7: #{tpu_custom_call.1} parent=1 // loop_footer_branch
      %28 = sbr.rel target = $region3
    $region8: #{tpu_custom_call.1} parent=1 // loop_exit
      _
    %1329 = vsyncpa [#allocation4], 1
    %s1330 = scalar_lea.sflag [#allocation4], 1
    %1331 = vsyncpa %s1330, 1
    %1332 = vsyncpa [#allocation7], 1
    %s1333 = scalar_lea.sflag [#allocation7], 1
    %1334 = vsyncpa %s1333, 1
    %1335 = vsyncpa [#allocation10], 1
    %1336 = vsyncpa [#allocation13], 1
    %1337 = vsyncpa [#allocation16], 1
    %1338 = vsyncpa [#allocation5], 1
    %s1339 = scalar_lea.sflag [#allocation5], 1
    %1340 = vsyncpa %s1339, 1

</llo_original>
